<compile_context>
chip_gen: v7x
topology: tpu7x:2x2x1
jax: 0.10.0
libtpu: 0.0.40
codegen_flags: <defaults>
</compile_context>

<pallas_src>
import functools

import jax
import jax.numpy as jnp
from jax.experimental import pallas as pl
from jax.experimental.pallas import tpu as pltpu


# ----------------------------------------------------------------------------
# Fused kernel: LSTM encoder + LSTMCell decoder (+ Attention) + fc head
# ----------------------------------------------------------------------------
def _net_fused_kernel(x_ref, meteo_ref,
                      w_ih_ref, w_hh_ref, b_ref,
                      cw_ih_ref, cw_hh_ref, cb_ref,
                      w1_ref, b1_ref, w2a_ref, w2b_ref, b2_ref,
                      wfc_ref, bfc_ref,
                      out_ref,
                      *, seq_len, hidden_dim, nr_days, use_attention):
    T, H, ND = seq_len, hidden_dim, nr_days
    bt = x_ref.shape[1]                      # batch tile handled by this core

    # ---- Hoist every weight/bias VMEM->vreg load out of the unrolled loops --
    w_ih, w_hh, b = w_ih_ref[...], w_hh_ref[...], b_ref[...]
    cw_ih, cw_hh, cb = cw_ih_ref[...], cw_hh_ref[...], cb_ref[...]
    wfc, bfc = wfc_ref[...], bfc_ref[...]
    if use_attention:
        w1, b1 = w1_ref[...], b1_ref[...]
        w2a, w2b, b2 = w2a_ref[...], w2b_ref[...], b2_ref[...]

    def gate_update(gates, c):
        # One sigmoid + one tanh over the whole [bt, 4H] gates value, then
        # lane-slice i/f/g/o (3 EUP pushes per step incl. tanh(c_new) instead
        # of 5 per-slice transcendentals).
        s_all = jax.nn.sigmoid(gates)
        g_all = jnp.tanh(gates)
        i = s_all[:, 0 * H:1 * H]
        f = s_all[:, 1 * H:2 * H]
        g = g_all[:, 2 * H:3 * H]
        o = s_all[:, 3 * H:4 * H]
        c_new = f * c + i * g
        h_new = o * jnp.tanh(c_new)
        return h_new, c_new

    h = jnp.zeros((bt, H), jnp.float32)
    c = jnp.zeros((bt, H), jnp.float32)

    # ---- Encoder (nn.LSTM, 1 layer, batch_first). Encoder states kept in
    # ---- vregs via a Python list; no VMEM scratch stores / reloads.
    enc_list = []
    for t in range(T):                                   # short, fixed: unroll
        gates = (jnp.dot(x_ref[t], w_ih, preferred_element_type=jnp.float32)
                 + jnp.dot(h, w_hh, preferred_element_type=jnp.float32)
                 + b)
        h, c = gate_update(gates, c)
        if use_attention:
            enc_list.append(h)

    if use_attention:
        enc = jnp.stack(enc_list, axis=0)                # [T, bt, H], in vregs

    # ---- Decoder: nr_days LSTMCell steps (+ optional attention) + fc head ---
    cols = []
    for d in range(ND):                                  # short, fixed: unroll
        gates = (jnp.dot(meteo_ref[d], cw_ih, preferred_element_type=jnp.float32)
                 + jnp.dot(h, cw_hh, preferred_element_type=jnp.float32)
                 + cb)
        h, c = gate_update(gates, c)

        if use_attention:
            # att_weights = softmax_T( sum_H enc * W1(h) )
            proj = jnp.dot(h, w1, preferred_element_type=jnp.float32) + b1
            scores = jnp.sum(enc * proj[None, :, :], axis=-1)        # [T, bt]
            s_max = jnp.max(scores, axis=0, keepdims=True)           # [1, bt]
            e = jnp.exp(scores - s_max)
            inv = pl.reciprocal(jnp.sum(e, axis=0, keepdims=True),
                                approx=True)                         # EUP slot
            aw = e * inv                                             # [T, bt]
            at = jnp.sum(aw[:, :, None] * enc, axis=0)               # [bt, H]
            # W2(cat(at, h)) split into two matmuls (avoids in-kernel concat)
            vt = (jnp.dot(at, w2a, preferred_element_type=jnp.float32)
                  + jnp.dot(h, w2b, preferred_element_type=jnp.float32)
                  + b2)
            ot = jnp.tanh(vt)           # dropout == identity (eval mode)
        else:
            ot = h

        # fc = Linear(H, 1): broadcast-multiply + lane reduce; keep the per-day
        # columns in vregs and emit a single dense store after the loop.
        cols.append(jnp.sum(ot * wfc, axis=-1, keepdims=True))       # [bt, 1]

    out_ref[...] = jnp.concatenate(cols, axis=1) + bfc               # [bt, ND]


# ----------------------------------------------------------------------------
# VMEM budget derived from the actual resident buffers (clamped for v7x 64MiB)
# ----------------------------------------------------------------------------
def _vmem_limit_bytes(bt, T, ND, D, Dm, H):
    f32 = 4
    io_blocks = 2 * (T * bt * D + ND * bt * Dm + bt * ND)   # double-buffered
    weights = ((D + H) * 4 * H + 4 * H            # encoder LSTM
               + (Dm + H) * 4 * H + 4 * H         # decoder LSTMCell
               + 3 * H * H + 3 * H                # attention W1 / W2a / W2b + b
               + H + 1)                           # fc
    live = T * bt * H + 4 * bt * 4 * H + ND * bt * H   # enc states / gate temps
    total = f32 * (io_blocks + weights + live)
    return int(min(max(4 * total, 4 << 20), 32 << 20))


# ----------------------------------------------------------------------------
# Net.forward wrapper (single pallas_call, batch-tiled "parallel" grid)
# ----------------------------------------------------------------------------
@functools.partial(jax.jit, static_argnames=("use_attention",))
def net_forward(params, x, meteo, use_attention=False):
    # x: [B, T, D_in], meteo: [B, nr_days, 6]  (batch-first, like PyTorch)
    B, T, D = x.shape
    ND, Dm = meteo.shape[1], meteo.shape[2]
    H = params["lstm_w_hh"].shape[0]          # weights stored as [in, out]

    assert H % 8 == 0, "hidden_dim must be a multiple of 8 for aligned gates"

    # Batch tile: 8 sublanes per tile when the batch splits evenly, so v7x's
    # second TensorCore takes half the batch; otherwise a single full-B tile.
    bt = 8 if (B % 8 == 0 and B > 8) else B
    assert B % bt == 0
    n_tiles = B // bt

    # Time-major / day-major so the kernel's per-step x_ref[t] / meteo_ref[d]
    # is a contiguous [bt, D] block.
    # TODO(synk): if T*B*D grows, fold this transpose into a T-grid BlockSpec
    #             index_map instead of a standalone HBM copy.
    x_tm = jnp.transpose(x, (1, 0, 2))        # [T, B, D]
    m_dm = jnp.transpose(meteo, (1, 0, 2))    # [ND, B, 6]

    weight_args = (params["lstm_w_ih"], params["lstm_w_hh"], params["lstm_b"],
                   params["cell_w_ih"], params["cell_w_hh"], params["cell_b"],
                   params["att_w1"], params["att_b1"],
                   params["att_w2a"], params["att_w2b"], params["att_b2"],
                   params["fc_w"], params["fc_b"])

    # Full-shape blocks with constant index maps -> weights stay VMEM resident
    # across the batch-tile grid (no re-DMA).
    weight_specs = [pl.BlockSpec(w.shape, lambda i, n=w.ndim: (0,) * n)
                    for w in weight_args]
    in_specs = ([pl.BlockSpec((T, bt, D), lambda i: (0, i, 0)),
                 pl.BlockSpec((ND, bt, Dm), lambda i: (0, i, 0))]
                + weight_specs)
    out_spec = pl.BlockSpec((bt, ND), lambda i: (i, 0))

    kernel = functools.partial(_net_fused_kernel, seq_len=T, hidden_dim=H,
                               nr_days=ND, use_attention=use_attention)

    return pl.pallas_call(
        kernel,
        out_shape=jax.ShapeDtypeStruct((B, ND), jnp.float32),
        grid=(n_tiles,),
        in_specs=in_specs,
        out_specs=out_spec,
        compiler_params=pltpu.CompilerParams(
            dimension_semantics=("parallel",),
            vmem_limit_bytes=_vmem_limit_bytes(bt, T, ND, D, Dm, H)),
    )(x_tm, m_dm, *weight_args)


# ----------------------------------------------------------------------------
# Pure-JAX reference (for a correctness check); uses the same [in, out] layout
# ----------------------------------------------------------------------------
def net_ref(params, x, meteo, use_attention=False):
    B, T, D = x.shape
    H = params["lstm_w_hh"].shape[0]

    def step(carry, x_t):
        h, c = carry
        gates = (x_t @ params["lstm_w_ih"] + h @ params["lstm_w_hh"]
                 + params["lstm_b"][0])
        i, f, g, o = jnp.split(gates, 4, axis=-1)
        c = jax.nn.sigmoid(f) * c + jax.nn.sigmoid(i) * jnp.tanh(g)
        h = jax.nn.sigmoid(o) * jnp.tanh(c)
        return (h, c), h

    (h, c), hs = jax.lax.scan(step,
                              (jnp.zeros((B, H)), jnp.zeros((B, H))),
                              jnp.transpose(x, (1, 0, 2)))
    enc = jnp.transpose(hs, (1, 0, 2))                          # [B, T, H]

    outs = []
    for d in range(meteo.shape[1]):
        gates = (meteo[:, d, :] @ params["cell_w_ih"]
                 + h @ params["cell_w_hh"] + params["cell_b"][0])
        i, f, g, o = jnp.split(gates, 4, axis=-1)
        c = jax.nn.sigmoid(f) * c + jax.nn.sigmoid(i) * jnp.tanh(g)
        h = jax.nn.sigmoid(o) * jnp.tanh(c)
        ot = h
        if use_attention:
            proj = h @ params["att_w1"] + params["att_b1"][0]
            scores = jnp.einsum("bth,bh->bt", enc, proj)
            aw = jax.nn.softmax(scores, axis=1)
            at = jnp.einsum("bt,bth->bh", aw, enc)
            vt = (at @ params["att_w2a"] + h @ params["att_w2b"]
                  + params["att_b2"][0])
            ot = jnp.tanh(vt)
        outs.append(ot @ params["fc_w"].T + params["fc_b"][0])
    return jnp.concatenate(outs, axis=1)


# ----------------------------------------------------------------------------
# Deterministic parameter construction + run
# ----------------------------------------------------------------------------
def make_params(key, input_dim, hidden_dim):
    """All matmul weights are stored pre-transposed ([in, out]) relative to
    PyTorch's [out, in] layout so the kernel never transposes in-loop.
    NOTE: when importing real PyTorch weights, b_ih + b_hh must be pre-summed
    into the single [1, 4H] bias used here (same for the LSTMCell bias)."""
    H = hidden_dim
    ks = jax.random.split(key, 12)
    rnd = lambda k, s: jax.random.normal(k, s, jnp.float32) * 0.1
    return {
        "lstm_w_ih": rnd(ks[0], (input_dim, 4 * H)),
        "lstm_w_hh": rnd(ks[1], (H, 4 * H)),
        "lstm_b": rnd(ks[2], (1, 4 * H)),
        "cell_w_ih": rnd(ks[3], (6, 4 * H)),
        "cell_w_hh": rnd(ks[4], (H, 4 * H)),
        "cell_b": rnd(ks[5], (1, 4 * H)),
        "att_w1": rnd(ks[6], (H, H)),
        "att_b1": rnd(ks[7], (1, H)),
        "att_w2a": rnd(ks[8], (H, H)),
        "att_w2b": rnd(ks[9], (H, H)),
        "att_b2": rnd(ks[10], (1, H)),
        "fc_w": rnd(ks[11], (1, H)),
        "fc_b": jnp.zeros((1, 1), jnp.float32),
    }


if __name__ == "__main__":
    # B=16 exercises the 2-tile "parallel" batch grid (bt=8); still small.
    B, T, INPUT_DIM, HIDDEN, NR_DAYS = 16, 8, 6, 32, 2

    key = jax.random.PRNGKey(0)
    k_x, k_m, k_p = jax.random.split(key, 3)
    x = jax.random.normal(k_x, (B, T, INPUT_DIM), jnp.float32)
    meteo = jax.random.normal(k_m, (B, NR_DAYS, 6), jnp.float32)
    params = make_params(k_p, INPUT_DIM, HIDDEN)

    ok = True
    for use_att in (False, True):
        out = jax.block_until_ready(net_forward(params, x, meteo, use_att))
        ref = net_ref(params, x, meteo, use_att)
        assert out.shape == (B, NR_DAYS)
        # slightly relaxed tolerance: attention path uses the approx (EUP)
        # reciprocal for the softmax normalizer.
        ok &= bool(jnp.allclose(out, ref, atol=2e-3, rtol=2e-3))

    if ok:
        print("KERNEL_OK")
</pallas_src>

<mosaic_0001>
module attributes {stable_mosaic.version = 11 : i64} {
  func.func @_net_fused_kernel(%arg0: i32, %arg1: memref<8x8x6xf32, #tpu.memory_space<vmem>>, %arg2: memref<2x8x6xf32, #tpu.memory_space<vmem>>, %arg3: memref<6x128xf32, #tpu.memory_space<vmem>>, %arg4: memref<32x128xf32, #tpu.memory_space<vmem>>, %arg5: memref<1x128xf32, #tpu.memory_space<vmem>>, %arg6: memref<6x128xf32, #tpu.memory_space<vmem>>, %arg7: memref<32x128xf32, #tpu.memory_space<vmem>>, %arg8: memref<1x128xf32, #tpu.memory_space<vmem>>, %arg9: memref<32x32xf32, #tpu.memory_space<vmem>>, %arg10: memref<1x32xf32, #tpu.memory_space<vmem>>, %arg11: memref<32x32xf32, #tpu.memory_space<vmem>>, %arg12: memref<32x32xf32, #tpu.memory_space<vmem>>, %arg13: memref<1x32xf32, #tpu.memory_space<vmem>>, %arg14: memref<1x32xf32, #tpu.memory_space<vmem>>, %arg15: memref<1x1xf32, #tpu.memory_space<vmem>>, %arg16: memref<8x2xf32, #tpu.memory_space<vmem>>) attributes {dimension_semantics = [#tpu.dimension_semantics<parallel>], iteration_bounds = array<i64: 2>, scalar_prefetch = 0 : i64, scratch_operands = 0 : i64, tpu.core_type = #tpu.core_type<tc>, window_params = [{transform_indices = @transform_0, window_bounds = array<i64: 8, 8, 6>}, {transform_indices = @transform_1, window_bounds = array<i64: 2, 8, 6>}, {pipeline_mode = #tpu.pipeline_mode<synchronous>, transform_indices = @transform_2, window_bounds = array<i64: 6, 128>}, {pipeline_mode = #tpu.pipeline_mode<synchronous>, transform_indices = @transform_3, window_bounds = array<i64: 32, 128>}, {pipeline_mode = #tpu.pipeline_mode<synchronous>, transform_indices = @transform_4, window_bounds = array<i64: 1, 128>}, {pipeline_mode = #tpu.pipeline_mode<synchronous>, transform_indices = @transform_5, window_bounds = array<i64: 6, 128>}, {pipeline_mode = #tpu.pipeline_mode<synchronous>, transform_indices = @transform_6, window_bounds = array<i64: 32, 128>}, {pipeline_mode = #tpu.pipeline_mode<synchronous>, transform_indices = @transform_7, window_bounds = array<i64: 1, 128>}, {pipeline_mode = #tpu.pipeline_mode<synchronous>, transform_indices = @transform_8, window_bounds = array<i64: 32, 32>}, {pipeline_mode = #tpu.pipeline_mode<synchronous>, transform_indices = @transform_9, window_bounds = array<i64: 1, 32>}, {pipeline_mode = #tpu.pipeline_mode<synchronous>, transform_indices = @transform_10, window_bounds = array<i64: 32, 32>}, {pipeline_mode = #tpu.pipeline_mode<synchronous>, transform_indices = @transform_11, window_bounds = array<i64: 32, 32>}, {pipeline_mode = #tpu.pipeline_mode<synchronous>, transform_indices = @transform_12, window_bounds = array<i64: 1, 32>}, {pipeline_mode = #tpu.pipeline_mode<synchronous>, transform_indices = @transform_13, window_bounds = array<i64: 1, 32>}, {pipeline_mode = #tpu.pipeline_mode<synchronous>, transform_indices = @transform_14, window_bounds = array<i64: 1, 1>}, {transform_indices = @transform_15, window_bounds = array<i64: 8, 2>}]} {
    %c0 = arith.constant 0 : index
    %c0_0 = arith.constant 0 : index
    %0 = vector.load %arg3[%c0, %c0_0] : memref<6x128xf32, #tpu.memory_space<vmem>>, vector<6x128xf32>
    %c0_1 = arith.constant 0 : index
    %c0_2 = arith.constant 0 : index
    %1 = vector.load %arg4[%c0_1, %c0_2] : memref<32x128xf32, #tpu.memory_space<vmem>>, vector<32x128xf32>
    %c0_3 = arith.constant 0 : index
    %c0_4 = arith.constant 0 : index
    %2 = vector.load %arg5[%c0_3, %c0_4] : memref<1x128xf32, #tpu.memory_space<vmem>>, vector<1x128xf32>
    %c0_5 = arith.constant 0 : index
    %c0_6 = arith.constant 0 : index
    %3 = vector.load %arg6[%c0_5, %c0_6] : memref<6x128xf32, #tpu.memory_space<vmem>>, vector<6x128xf32>
    %c0_7 = arith.constant 0 : index
    %c0_8 = arith.constant 0 : index
    %4 = vector.load %arg7[%c0_7, %c0_8] : memref<32x128xf32, #tpu.memory_space<vmem>>, vector<32x128xf32>
    %c0_9 = arith.constant 0 : index
    %c0_10 = arith.constant 0 : index
    %5 = vector.load %arg8[%c0_9, %c0_10] : memref<1x128xf32, #tpu.memory_space<vmem>>, vector<1x128xf32>
    %c0_11 = arith.constant 0 : index
    %c0_12 = arith.constant 0 : index
    %6 = vector.load %arg14[%c0_11, %c0_12] : memref<1x32xf32, #tpu.memory_space<vmem>>, vector<1x32xf32>
    %c0_13 = arith.constant 0 : index
    %c0_14 = arith.constant 0 : index
    %7 = vector.load %arg15[%c0_13, %c0_14] : memref<1x1xf32, #tpu.memory_space<vmem>>, vector<1x1xf32>
    %cst = arith.constant 0.000000e+00 : f32
    %8 = vector.broadcast %cst : f32 to vector<8x32xf32>
    %cst_15 = arith.constant 0.000000e+00 : f32
    %9 = vector.broadcast %cst_15 : f32 to vector<8x32xf32>
    %c0_16 = arith.constant 0 : index
    %c0_17 = arith.constant 0 : index
    %c0_18 = arith.constant 0 : index
    %10 = vector.load %arg1[%c0_16, %c0_17, %c0_18] : memref<8x8x6xf32, #tpu.memory_space<vmem>>, vector<1x8x6xf32>
    %11 = vector.shape_cast %10 : vector<1x8x6xf32> to vector<8x6xf32>
    %cst_19 = arith.constant dense<0.000000e+00> : vector<8x128xf32>
    %12 = tpu.matmul %11, %0, %cst_19 {dimension_numbers = #tpu.dot_dimension_numbers<[1], [0], [0], [1], [0, 0, 1, 1], [], []>} : vector<8x6xf32>, vector<6x128xf32>, vector<8x128xf32> -> vector<8x128xf32>
    %cst_20 = arith.constant dense<0.000000e+00> : vector<8x128xf32>
    %13 = tpu.matmul %8, %1, %cst_20 {dimension_numbers = #tpu.dot_dimension_numbers<[1], [0], [0], [1], [0, 0, 1, 1], [], []>} : vector<8x32xf32>, vector<32x128xf32>, vector<8x128xf32> -> vector<8x128xf32>
    %14 = arith.addf %12, %13 : vector<8x128xf32>
    %15 = vector.broadcast %2 : vector<1x128xf32> to vector<8x128xf32>
    %16 = arith.addf %14, %15 : vector<8x128xf32>
    %17 = arith.negf %16 : vector<8x128xf32>
    %18 = math.exp %17 : vector<8x128xf32>
    %cst_21 = arith.constant 1.000000e+00 : f32
    %19 = vector.broadcast %cst_21 : f32 to vector<8x128xf32>
    %20 = arith.addf %19, %18 : vector<8x128xf32>
    %21 = arith.divf %19, %20 : vector<8x128xf32>
    %22 = math.tanh %16 : vector<8x128xf32>
    %23 = vector.extract_strided_slice %21 {offsets = [0, 0], sizes = [8, 32], strides = [1, 1]} : vector<8x128xf32> to vector<8x32xf32>
    %24 = vector.extract_strided_slice %21 {offsets = [0, 32], sizes = [8, 32], strides = [1, 1]} : vector<8x128xf32> to vector<8x32xf32>
    %25 = vector.extract_strided_slice %22 {offsets = [0, 64], sizes = [8, 32], strides = [1, 1]} : vector<8x128xf32> to vector<8x32xf32>
    %26 = vector.extract_strided_slice %21 {offsets = [0, 96], sizes = [8, 32], strides = [1, 1]} : vector<8x128xf32> to vector<8x32xf32>
    %27 = arith.mulf %24, %9 : vector<8x32xf32>
    %28 = arith.mulf %23, %25 : vector<8x32xf32>
    %29 = arith.addf %27, %28 : vector<8x32xf32>
    %30 = math.tanh %29 : vector<8x32xf32>
    %31 = arith.mulf %26, %30 : vector<8x32xf32>
    %c1 = arith.constant 1 : index
    %c0_22 = arith.constant 0 : index
    %c0_23 = arith.constant 0 : index
    %32 = vector.load %arg1[%c1, %c0_22, %c0_23] : memref<8x8x6xf32, #tpu.memory_space<vmem>>, vector<1x8x6xf32>
    %33 = vector.shape_cast %32 : vector<1x8x6xf32> to vector<8x6xf32>
    %cst_24 = arith.constant dense<0.000000e+00> : vector<8x128xf32>
    %34 = tpu.matmul %33, %0, %cst_24 {dimension_numbers = #tpu.dot_dimension_numbers<[1], [0], [0], [1], [0, 0, 1, 1], [], []>} : vector<8x6xf32>, vector<6x128xf32>, vector<8x128xf32> -> vector<8x128xf32>
    %cst_25 = arith.constant dense<0.000000e+00> : vector<8x128xf32>
    %35 = tpu.matmul %31, %1, %cst_25 {dimension_numbers = #tpu.dot_dimension_numbers<[1], [0], [0], [1], [0, 0, 1, 1], [], []>} : vector<8x32xf32>, vector<32x128xf32>, vector<8x128xf32> -> vector<8x128xf32>
    %36 = arith.addf %34, %35 : vector<8x128xf32>
    %37 = vector.broadcast %2 : vector<1x128xf32> to vector<8x128xf32>
    %38 = arith.addf %36, %37 : vector<8x128xf32>
    %39 = arith.negf %38 : vector<8x128xf32>
    %40 = math.exp %39 : vector<8x128xf32>
    %cst_26 = arith.constant 1.000000e+00 : f32
    %41 = vector.broadcast %cst_26 : f32 to vector<8x128xf32>
    %42 = arith.addf %41, %40 : vector<8x128xf32>
    %43 = arith.divf %41, %42 : vector<8x128xf32>
    %44 = math.tanh %38 : vector<8x128xf32>
    %45 = vector.extract_strided_slice %43 {offsets = [0, 0], sizes = [8, 32], strides = [1, 1]} : vector<8x128xf32> to vector<8x32xf32>
    %46 = vector.extract_strided_slice %43 {offsets = [0, 32], sizes = [8, 32], strides = [1, 1]} : vector<8x128xf32> to vector<8x32xf32>
    %47 = vector.extract_strided_slice %44 {offsets = [0, 64], sizes = [8, 32], strides = [1, 1]} : vector<8x128xf32> to vector<8x32xf32>
    %48 = vector.extract_strided_slice %43 {offsets = [0, 96], sizes = [8, 32], strides = [1, 1]} : vector<8x128xf32> to vector<8x32xf32>
    %49 = arith.mulf %46, %29 : vector<8x32xf32>
    %50 = arith.mulf %45, %47 : vector<8x32xf32>
    %51 = arith.addf %49, %50 : vector<8x32xf32>
    %52 = math.tanh %51 : vector<8x32xf32>
    %53 = arith.mulf %48, %52 : vector<8x32xf32>
    %c2 = arith.constant 2 : index
    %c0_27 = arith.constant 0 : index
    %c0_28 = arith.constant 0 : index
    %54 = vector.load %arg1[%c2, %c0_27, %c0_28] : memref<8x8x6xf32, #tpu.memory_space<vmem>>, vector<1x8x6xf32>
    %55 = vector.shape_cast %54 : vector<1x8x6xf32> to vector<8x6xf32>
    %cst_29 = arith.constant dense<0.000000e+00> : vector<8x128xf32>
    %56 = tpu.matmul %55, %0, %cst_29 {dimension_numbers = #tpu.dot_dimension_numbers<[1], [0], [0], [1], [0, 0, 1, 1], [], []>} : vector<8x6xf32>, vector<6x128xf32>, vector<8x128xf32> -> vector<8x128xf32>
    %cst_30 = arith.constant dense<0.000000e+00> : vector<8x128xf32>
    %57 = tpu.matmul %53, %1, %cst_30 {dimension_numbers = #tpu.dot_dimension_numbers<[1], [0], [0], [1], [0, 0, 1, 1], [], []>} : vector<8x32xf32>, vector<32x128xf32>, vector<8x128xf32> -> vector<8x128xf32>
    %58 = arith.addf %56, %57 : vector<8x128xf32>
    %59 = vector.broadcast %2 : vector<1x128xf32> to vector<8x128xf32>
    %60 = arith.addf %58, %59 : vector<8x128xf32>
    %61 = arith.negf %60 : vector<8x128xf32>
    %62 = math.exp %61 : vector<8x128xf32>
    %cst_31 = arith.constant 1.000000e+00 : f32
    %63 = vector.broadcast %cst_31 : f32 to vector<8x128xf32>
    %64 = arith.addf %63, %62 : vector<8x128xf32>
    %65 = arith.divf %63, %64 : vector<8x128xf32>
    %66 = math.tanh %60 : vector<8x128xf32>
    %67 = vector.extract_strided_slice %65 {offsets = [0, 0], sizes = [8, 32], strides = [1, 1]} : vector<8x128xf32> to vector<8x32xf32>
    %68 = vector.extract_strided_slice %65 {offsets = [0, 32], sizes = [8, 32], strides = [1, 1]} : vector<8x128xf32> to vector<8x32xf32>
    %69 = vector.extract_strided_slice %66 {offsets = [0, 64], sizes = [8, 32], strides = [1, 1]} : vector<8x128xf32> to vector<8x32xf32>
    %70 = vector.extract_strided_slice %65 {offsets = [0, 96], sizes = [8, 32], strides = [1, 1]} : vector<8x128xf32> to vector<8x32xf32>
    %71 = arith.mulf %68, %51 : vector<8x32xf32>
    %72 = arith.mulf %67, %69 : vector<8x32xf32>
    %73 = arith.addf %71, %72 : vector<8x32xf32>
    %74 = math.tanh %73 : vector<8x32xf32>
    %75 = arith.mulf %70, %74 : vector<8x32xf32>
    %c3 = arith.constant 3 : index
    %c0_32 = arith.constant 0 : index
    %c0_33 = arith.constant 0 : index
    %76 = vector.load %arg1[%c3, %c0_32, %c0_33] : memref<8x8x6xf32, #tpu.memory_space<vmem>>, vector<1x8x6xf32>
    %77 = vector.shape_cast %76 : vector<1x8x6xf32> to vector<8x6xf32>
    %cst_34 = arith.constant dense<0.000000e+00> : vector<8x128xf32>
    %78 = tpu.matmul %77, %0, %cst_34 {dimension_numbers = #tpu.dot_dimension_numbers<[1], [0], [0], [1], [0, 0, 1, 1], [], []>} : vector<8x6xf32>, vector<6x128xf32>, vector<8x128xf32> -> vector<8x128xf32>
    %cst_35 = arith.constant dense<0.000000e+00> : vector<8x128xf32>
    %79 = tpu.matmul %75, %1, %cst_35 {dimension_numbers = #tpu.dot_dimension_numbers<[1], [0], [0], [1], [0, 0, 1, 1], [], []>} : vector<8x32xf32>, vector<32x128xf32>, vector<8x128xf32> -> vector<8x128xf32>
    %80 = arith.addf %78, %79 : vector<8x128xf32>
    %81 = vector.broadcast %2 : vector<1x128xf32> to vector<8x128xf32>
    %82 = arith.addf %80, %81 : vector<8x128xf32>
    %83 = arith.negf %82 : vector<8x128xf32>
    %84 = math.exp %83 : vector<8x128xf32>
    %cst_36 = arith.constant 1.000000e+00 : f32
    %85 = vector.broadcast %cst_36 : f32 to vector<8x128xf32>
    %86 = arith.addf %85, %84 : vector<8x128xf32>
    %87 = arith.divf %85, %86 : vector<8x128xf32>
    %88 = math.tanh %82 : vector<8x128xf32>
    %89 = vector.extract_strided_slice %87 {offsets = [0, 0], sizes = [8, 32], strides = [1, 1]} : vector<8x128xf32> to vector<8x32xf32>
    %90 = vector.extract_strided_slice %87 {offsets = [0, 32], sizes = [8, 32], strides = [1, 1]} : vector<8x128xf32> to vector<8x32xf32>
    %91 = vector.extract_strided_slice %88 {offsets = [0, 64], sizes = [8, 32], strides = [1, 1]} : vector<8x128xf32> to vector<8x32xf32>
    %92 = vector.extract_strided_slice %87 {offsets = [0, 96], sizes = [8, 32], strides = [1, 1]} : vector<8x128xf32> to vector<8x32xf32>
    %93 = arith.mulf %90, %73 : vector<8x32xf32>
    %94 = arith.mulf %89, %91 : vector<8x32xf32>
    %95 = arith.addf %93, %94 : vector<8x32xf32>
    %96 = math.tanh %95 : vector<8x32xf32>
    %97 = arith.mulf %92, %96 : vector<8x32xf32>
    %c4 = arith.constant 4 : index
    %c0_37 = arith.constant 0 : index
    %c0_38 = arith.constant 0 : index
    %98 = vector.load %arg1[%c4, %c0_37, %c0_38] : memref<8x8x6xf32, #tpu.memory_space<vmem>>, vector<1x8x6xf32>
    %99 = vector.shape_cast %98 : vector<1x8x6xf32> to vector<8x6xf32>
    %cst_39 = arith.constant dense<0.000000e+00> : vector<8x128xf32>
    %100 = tpu.matmul %99, %0, %cst_39 {dimension_numbers = #tpu.dot_dimension_numbers<[1], [0], [0], [1], [0, 0, 1, 1], [], []>} : vector<8x6xf32>, vector<6x128xf32>, vector<8x128xf32> -> vector<8x128xf32>
    %cst_40 = arith.constant dense<0.000000e+00> : vector<8x128xf32>
    %101 = tpu.matmul %97, %1, %cst_40 {dimension_numbers = #tpu.dot_dimension_numbers<[1], [0], [0], [1], [0, 0, 1, 1], [], []>} : vector<8x32xf32>, vector<32x128xf32>, vector<8x128xf32> -> vector<8x128xf32>
    %102 = arith.addf %100, %101 : vector<8x128xf32>
    %103 = vector.broadcast %2 : vector<1x128xf32> to vector<8x128xf32>
    %104 = arith.addf %102, %103 : vector<8x128xf32>
    %105 = arith.negf %104 : vector<8x128xf32>
    %106 = math.exp %105 : vector<8x128xf32>
    %cst_41 = arith.constant 1.000000e+00 : f32
    %107 = vector.broadcast %cst_41 : f32 to vector<8x128xf32>
    %108 = arith.addf %107, %106 : vector<8x128xf32>
    %109 = arith.divf %107, %108 : vector<8x128xf32>
    %110 = math.tanh %104 : vector<8x128xf32>
    %111 = vector.extract_strided_slice %109 {offsets = [0, 0], sizes = [8, 32], strides = [1, 1]} : vector<8x128xf32> to vector<8x32xf32>
    %112 = vector.extract_strided_slice %109 {offsets = [0, 32], sizes = [8, 32], strides = [1, 1]} : vector<8x128xf32> to vector<8x32xf32>
    %113 = vector.extract_strided_slice %110 {offsets = [0, 64], sizes = [8, 32], strides = [1, 1]} : vector<8x128xf32> to vector<8x32xf32>
    %114 = vector.extract_strided_slice %109 {offsets = [0, 96], sizes = [8, 32], strides = [1, 1]} : vector<8x128xf32> to vector<8x32xf32>
    %115 = arith.mulf %112, %95 : vector<8x32xf32>
    %116 = arith.mulf %111, %113 : vector<8x32xf32>
    %117 = arith.addf %115, %116 : vector<8x32xf32>
    %118 = math.tanh %117 : vector<8x32xf32>
    %119 = arith.mulf %114, %118 : vector<8x32xf32>
    %c5 = arith.constant 5 : index
    %c0_42 = arith.constant 0 : index
    %c0_43 = arith.constant 0 : index
    %120 = vector.load %arg1[%c5, %c0_42, %c0_43] : memref<8x8x6xf32, #tpu.memory_space<vmem>>, vector<1x8x6xf32>
    %121 = vector.shape_cast %120 : vector<1x8x6xf32> to vector<8x6xf32>
    %cst_44 = arith.constant dense<0.000000e+00> : vector<8x128xf32>
    %122 = tpu.matmul %121, %0, %cst_44 {dimension_numbers = #tpu.dot_dimension_numbers<[1], [0], [0], [1], [0, 0, 1, 1], [], []>} : vector<8x6xf32>, vector<6x128xf32>, vector<8x128xf32> -> vector<8x128xf32>
    %cst_45 = arith.constant dense<0.000000e+00> : vector<8x128xf32>
    %123 = tpu.matmul %119, %1, %cst_45 {dimension_numbers = #tpu.dot_dimension_numbers<[1], [0], [0], [1], [0, 0, 1, 1], [], []>} : vector<8x32xf32>, vector<32x128xf32>, vector<8x128xf32> -> vector<8x128xf32>
    %124 = arith.addf %122, %123 : vector<8x128xf32>
    %125 = vector.broadcast %2 : vector<1x128xf32> to vector<8x128xf32>
    %126 = arith.addf %124, %125 : vector<8x128xf32>
    %127 = arith.negf %126 : vector<8x128xf32>
    %128 = math.exp %127 : vector<8x128xf32>
    %cst_46 = arith.constant 1.000000e+00 : f32
    %129 = vector.broadcast %cst_46 : f32 to vector<8x128xf32>
    %130 = arith.addf %129, %128 : vector<8x128xf32>
    %131 = arith.divf %129, %130 : vector<8x128xf32>
    %132 = math.tanh %126 : vector<8x128xf32>
    %133 = vector.extract_strided_slice %131 {offsets = [0, 0], sizes = [8, 32], strides = [1, 1]} : vector<8x128xf32> to vector<8x32xf32>
    %134 = vector.extract_strided_slice %131 {offsets = [0, 32], sizes = [8, 32], strides = [1, 1]} : vector<8x128xf32> to vector<8x32xf32>
    %135 = vector.extract_strided_slice %132 {offsets = [0, 64], sizes = [8, 32], strides = [1, 1]} : vector<8x128xf32> to vector<8x32xf32>
    %136 = vector.extract_strided_slice %131 {offsets = [0, 96], sizes = [8, 32], strides = [1, 1]} : vector<8x128xf32> to vector<8x32xf32>
    %137 = arith.mulf %134, %117 : vector<8x32xf32>
    %138 = arith.mulf %133, %135 : vector<8x32xf32>
    %139 = arith.addf %137, %138 : vector<8x32xf32>
    %140 = math.tanh %139 : vector<8x32xf32>
    %141 = arith.mulf %136, %140 : vector<8x32xf32>
    %c6 = arith.constant 6 : index
    %c0_47 = arith.constant 0 : index
    %c0_48 = arith.constant 0 : index
    %142 = vector.load %arg1[%c6, %c0_47, %c0_48] : memref<8x8x6xf32, #tpu.memory_space<vmem>>, vector<1x8x6xf32>
    %143 = vector.shape_cast %142 : vector<1x8x6xf32> to vector<8x6xf32>
    %cst_49 = arith.constant dense<0.000000e+00> : vector<8x128xf32>
    %144 = tpu.matmul %143, %0, %cst_49 {dimension_numbers = #tpu.dot_dimension_numbers<[1], [0], [0], [1], [0, 0, 1, 1], [], []>} : vector<8x6xf32>, vector<6x128xf32>, vector<8x128xf32> -> vector<8x128xf32>
    %cst_50 = arith.constant dense<0.000000e+00> : vector<8x128xf32>
    %145 = tpu.matmul %141, %1, %cst_50 {dimension_numbers = #tpu.dot_dimension_numbers<[1], [0], [0], [1], [0, 0, 1, 1], [], []>} : vector<8x32xf32>, vector<32x128xf32>, vector<8x128xf32> -> vector<8x128xf32>
    %146 = arith.addf %144, %145 : vector<8x128xf32>
    %147 = vector.broadcast %2 : vector<1x128xf32> to vector<8x128xf32>
    %148 = arith.addf %146, %147 : vector<8x128xf32>
    %149 = arith.negf %148 : vector<8x128xf32>
    %150 = math.exp %149 : vector<8x128xf32>
    %cst_51 = arith.constant 1.000000e+00 : f32
    %151 = vector.broadcast %cst_51 : f32 to vector<8x128xf32>
    %152 = arith.addf %151, %150 : vector<8x128xf32>
    %153 = arith.divf %151, %152 : vector<8x128xf32>
    %154 = math.tanh %148 : vector<8x128xf32>
    %155 = vector.extract_strided_slice %153 {offsets = [0, 0], sizes = [8, 32], strides = [1, 1]} : vector<8x128xf32> to vector<8x32xf32>
    %156 = vector.extract_strided_slice %153 {offsets = [0, 32], sizes = [8, 32], strides = [1, 1]} : vector<8x128xf32> to vector<8x32xf32>
    %157 = vector.extract_strided_slice %154 {offsets = [0, 64], sizes = [8, 32], strides = [1, 1]} : vector<8x128xf32> to vector<8x32xf32>
    %158 = vector.extract_strided_slice %153 {offsets = [0, 96], sizes = [8, 32], strides = [1, 1]} : vector<8x128xf32> to vector<8x32xf32>
    %159 = arith.mulf %156, %139 : vector<8x32xf32>
    %160 = arith.mulf %155, %157 : vector<8x32xf32>
    %161 = arith.addf %159, %160 : vector<8x32xf32>
    %162 = math.tanh %161 : vector<8x32xf32>
    %163 = arith.mulf %158, %162 : vector<8x32xf32>
    %c7 = arith.constant 7 : index
    %c0_52 = arith.constant 0 : index
    %c0_53 = arith.constant 0 : index
    %164 = vector.load %arg1[%c7, %c0_52, %c0_53] : memref<8x8x6xf32, #tpu.memory_space<vmem>>, vector<1x8x6xf32>
    %165 = vector.shape_cast %164 : vector<1x8x6xf32> to vector<8x6xf32>
    %cst_54 = arith.constant dense<0.000000e+00> : vector<8x128xf32>
    %166 = tpu.matmul %165, %0, %cst_54 {dimension_numbers = #tpu.dot_dimension_numbers<[1], [0], [0], [1], [0, 0, 1, 1], [], []>} : vector<8x6xf32>, vector<6x128xf32>, vector<8x128xf32> -> vector<8x128xf32>
    %cst_55 = arith.constant dense<0.000000e+00> : vector<8x128xf32>
    %167 = tpu.matmul %163, %1, %cst_55 {dimension_numbers = #tpu.dot_dimension_numbers<[1], [0], [0], [1], [0, 0, 1, 1], [], []>} : vector<8x32xf32>, vector<32x128xf32>, vector<8x128xf32> -> vector<8x128xf32>
    %168 = arith.addf %166, %167 : vector<8x128xf32>
    %169 = vector.broadcast %2 : vector<1x128xf32> to vector<8x128xf32>
    %170 = arith.addf %168, %169 : vector<8x128xf32>
    %171 = arith.negf %170 : vector<8x128xf32>
    %172 = math.exp %171 : vector<8x128xf32>
    %cst_56 = arith.constant 1.000000e+00 : f32
    %173 = vector.broadcast %cst_56 : f32 to vector<8x128xf32>
    %174 = arith.addf %173, %172 : vector<8x128xf32>
    %175 = arith.divf %173, %174 : vector<8x128xf32>
    %176 = math.tanh %170 : vector<8x128xf32>
    %177 = vector.extract_strided_slice %175 {offsets = [0, 0], sizes = [8, 32], strides = [1, 1]} : vector<8x128xf32> to vector<8x32xf32>
    %178 = vector.extract_strided_slice %175 {offsets = [0, 32], sizes = [8, 32], strides = [1, 1]} : vector<8x128xf32> to vector<8x32xf32>
    %179 = vector.extract_strided_slice %176 {offsets = [0, 64], sizes = [8, 32], strides = [1, 1]} : vector<8x128xf32> to vector<8x32xf32>
    %180 = vector.extract_strided_slice %175 {offsets = [0, 96], sizes = [8, 32], strides = [1, 1]} : vector<8x128xf32> to vector<8x32xf32>
    %181 = arith.mulf %178, %161 : vector<8x32xf32>
    %182 = arith.mulf %177, %179 : vector<8x32xf32>
    %183 = arith.addf %181, %182 : vector<8x32xf32>
    %184 = math.tanh %183 : vector<8x32xf32>
    %185 = arith.mulf %180, %184 : vector<8x32xf32>
    %c0_57 = arith.constant 0 : index
    %c0_58 = arith.constant 0 : index
    %c0_59 = arith.constant 0 : index
    %186 = vector.load %arg2[%c0_57, %c0_58, %c0_59] : memref<2x8x6xf32, #tpu.memory_space<vmem>>, vector<1x8x6xf32>
    %187 = vector.shape_cast %186 : vector<1x8x6xf32> to vector<8x6xf32>
    %cst_60 = arith.constant dense<0.000000e+00> : vector<8x128xf32>
    %188 = tpu.matmul %187, %3, %cst_60 {dimension_numbers = #tpu.dot_dimension_numbers<[1], [0], [0], [1], [0, 0, 1, 1], [], []>} : vector<8x6xf32>, vector<6x128xf32>, vector<8x128xf32> -> vector<8x128xf32>
    %cst_61 = arith.constant dense<0.000000e+00> : vector<8x128xf32>
    %189 = tpu.matmul %185, %4, %cst_61 {dimension_numbers = #tpu.dot_dimension_numbers<[1], [0], [0], [1], [0, 0, 1, 1], [], []>} : vector<8x32xf32>, vector<32x128xf32>, vector<8x128xf32> -> vector<8x128xf32>
    %190 = arith.addf %188, %189 : vector<8x128xf32>
    %191 = vector.broadcast %5 : vector<1x128xf32> to vector<8x128xf32>
    %192 = arith.addf %190, %191 : vector<8x128xf32>
    %193 = arith.negf %192 : vector<8x128xf32>
    %194 = math.exp %193 : vector<8x128xf32>
    %cst_62 = arith.constant 1.000000e+00 : f32
    %195 = vector.broadcast %cst_62 : f32 to vector<8x128xf32>
    %196 = arith.addf %195, %194 : vector<8x128xf32>
    %197 = arith.divf %195, %196 : vector<8x128xf32>
    %198 = math.tanh %192 : vector<8x128xf32>
    %199 = vector.extract_strided_slice %197 {offsets = [0, 0], sizes = [8, 32], strides = [1, 1]} : vector<8x128xf32> to vector<8x32xf32>
    %200 = vector.extract_strided_slice %197 {offsets = [0, 32], sizes = [8, 32], strides = [1, 1]} : vector<8x128xf32> to vector<8x32xf32>
    %201 = vector.extract_strided_slice %198 {offsets = [0, 64], sizes = [8, 32], strides = [1, 1]} : vector<8x128xf32> to vector<8x32xf32>
    %202 = vector.extract_strided_slice %197 {offsets = [0, 96], sizes = [8, 32], strides = [1, 1]} : vector<8x128xf32> to vector<8x32xf32>
    %203 = arith.mulf %200, %183 : vector<8x32xf32>
    %204 = arith.mulf %199, %201 : vector<8x32xf32>
    %205 = arith.addf %203, %204 : vector<8x32xf32>
    %206 = math.tanh %205 : vector<8x32xf32>
    %207 = arith.mulf %202, %206 : vector<8x32xf32>
    %208 = vector.broadcast %6 : vector<1x32xf32> to vector<8x32xf32>
    %209 = arith.mulf %207, %208 : vector<8x32xf32>
    %cst_63 = arith.constant dense<0.000000e+00> : vector<8xf32>
    %210 = vector.multi_reduction <add>, %209, %cst_63 [1] : vector<8x32xf32> to vector<8xf32>
    %211 = vector.shape_cast %210 : vector<8xf32> to vector<8x1xf32>
    %c1_64 = arith.constant 1 : index
    %c0_65 = arith.constant 0 : index
    %c0_66 = arith.constant 0 : index
    %212 = vector.load %arg2[%c1_64, %c0_65, %c0_66] : memref<2x8x6xf32, #tpu.memory_space<vmem>>, vector<1x8x6xf32>
    %213 = vector.shape_cast %212 : vector<1x8x6xf32> to vector<8x6xf32>
    %cst_67 = arith.constant dense<0.000000e+00> : vector<8x128xf32>
    %214 = tpu.matmul %213, %3, %cst_67 {dimension_numbers = #tpu.dot_dimension_numbers<[1], [0], [0], [1], [0, 0, 1, 1], [], []>} : vector<8x6xf32>, vector<6x128xf32>, vector<8x128xf32> -> vector<8x128xf32>
    %cst_68 = arith.constant dense<0.000000e+00> : vector<8x128xf32>
    %215 = tpu.matmul %207, %4, %cst_68 {dimension_numbers = #tpu.dot_dimension_numbers<[1], [0], [0], [1], [0, 0, 1, 1], [], []>} : vector<8x32xf32>, vector<32x128xf32>, vector<8x128xf32> -> vector<8x128xf32>
    %216 = arith.addf %214, %215 : vector<8x128xf32>
    %217 = vector.broadcast %5 : vector<1x128xf32> to vector<8x128xf32>
    %218 = arith.addf %216, %217 : vector<8x128xf32>
    %219 = arith.negf %218 : vector<8x128xf32>
    %220 = math.exp %219 : vector<8x128xf32>
    %cst_69 = arith.constant 1.000000e+00 : f32
    %221 = vector.broadcast %cst_69 : f32 to vector<8x128xf32>
    %222 = arith.addf %221, %220 : vector<8x128xf32>
    %223 = arith.divf %221, %222 : vector<8x128xf32>
    %224 = math.tanh %218 : vector<8x128xf32>
    %225 = vector.extract_strided_slice %223 {offsets = [0, 0], sizes = [8, 32], strides = [1, 1]} : vector<8x128xf32> to vector<8x32xf32>
    %226 = vector.extract_strided_slice %223 {offsets = [0, 32], sizes = [8, 32], strides = [1, 1]} : vector<8x128xf32> to vector<8x32xf32>
    %227 = vector.extract_strided_slice %224 {offsets = [0, 64], sizes = [8, 32], strides = [1, 1]} : vector<8x128xf32> to vector<8x32xf32>
    %228 = vector.extract_strided_slice %223 {offsets = [0, 96], sizes = [8, 32], strides = [1, 1]} : vector<8x128xf32> to vector<8x32xf32>
    %229 = arith.mulf %226, %205 : vector<8x32xf32>
    %230 = arith.mulf %225, %227 : vector<8x32xf32>
    %231 = arith.addf %229, %230 : vector<8x32xf32>
    %232 = math.tanh %231 : vector<8x32xf32>
    %233 = arith.mulf %228, %232 : vector<8x32xf32>
    %234 = vector.broadcast %6 : vector<1x32xf32> to vector<8x32xf32>
    %235 = arith.mulf %233, %234 : vector<8x32xf32>
    %cst_70 = arith.constant dense<0.000000e+00> : vector<8xf32>
    %236 = vector.multi_reduction <add>, %235, %cst_70 [1] : vector<8x32xf32> to vector<8xf32>
    %237 = vector.shape_cast %236 : vector<8xf32> to vector<8x1xf32>
    %238 = tpu.concatenate %211, %237 in 1 : vector<8x1xf32>, vector<8x1xf32> -> vector<8x2xf32>
    %239 = vector.broadcast %7 : vector<1x1xf32> to vector<8x2xf32>
    %240 = arith.addf %238, %239 : vector<8x2xf32>
    %c0_71 = arith.constant 0 : index
    %c0_72 = arith.constant 0 : index
    %241 = vector.load %arg16[%c0_71, %c0_72] : memref<8x2xf32, #tpu.memory_space<vmem>>, vector<8x2xf32>
    tpu.vector_store %arg16[%c0_71, %c0_72], %240 {strides = array<i32>} : memref<8x2xf32, #tpu.memory_space<vmem>>, vector<8x2xf32>,
    return
  }
  func.func @transform_0(%arg0: i32) -> (i32, i32, i32) {
    %c0_i32 = arith.constant 0 : i32
    %c0_i32_0 = arith.constant 0 : i32
    %c0_i32_1 = arith.constant 0 : i32
    return %c0_i32, %arg0, %c0_i32_0 : i32, i32, i32
  }
  func.func @transform_1(%arg0: i32) -> (i32, i32, i32) {
    %c0_i32 = arith.constant 0 : i32
    %c0_i32_0 = arith.constant 0 : i32
    %c0_i32_1 = arith.constant 0 : i32
    return %c0_i32, %arg0, %c0_i32_0 : i32, i32, i32
  }
  func.func @transform_2(%arg0: i32) -> (i32, i32) {
    %c0_i32 = arith.constant 0 : i32
    %c0_i32_0 = arith.constant 0 : i32
    %c0_i32_1 = arith.constant 0 : i32
    return %c0_i32, %c0_i32_0 : i32, i32
  }
  func.func @transform_3(%arg0: i32) -> (i32, i32) {
    %c0_i32 = arith.constant 0 : i32
    %c0_i32_0 = arith.constant 0 : i32
    %c0_i32_1 = arith.constant 0 : i32
    return %c0_i32, %c0_i32_0 : i32, i32
  }
  func.func @transform_4(%arg0: i32) -> (i32, i32) {
    %c0_i32 = arith.constant 0 : i32
    %c0_i32_0 = arith.constant 0 : i32
    %c0_i32_1 = arith.constant 0 : i32
    return %c0_i32, %c0_i32_0 : i32, i32
  }
  func.func @transform_5(%arg0: i32) -> (i32, i32) {
    %c0_i32 = arith.constant 0 : i32
    %c0_i32_0 = arith.constant 0 : i32
    %c0_i32_1 = arith.constant 0 : i32
    return %c0_i32, %c0_i32_0 : i32, i32
  }
  func.func @transform_6(%arg0: i32) -> (i32, i32) {
    %c0_i32 = arith.constant 0 : i32
    %c0_i32_0 = arith.constant 0 : i32
    %c0_i32_1 = arith.constant 0 : i32
    return %c0_i32, %c0_i32_0 : i32, i32
  }
  func.func @transform_7(%arg0: i32) -> (i32, i32) {
    %c0_i32 = arith.constant 0 : i32
    %c0_i32_0 = arith.constant 0 : i32
    %c0_i32_1 = arith.constant 0 : i32
    return %c0_i32, %c0_i32_0 : i32, i32
  }
  func.func @transform_8(%arg0: i32) -> (i32, i32) {
    %c0_i32 = arith.constant 0 : i32
    %c0_i32_0 = arith.constant 0 : i32
    %c0_i32_1 = arith.constant 0 : i32
    return %c0_i32, %c0_i32_0 : i32, i32
  }
  func.func @transform_9(%arg0: i32) -> (i32, i32) {
    %c0_i32 = arith.constant 0 : i32
    %c0_i32_0 = arith.constant 0 : i32
    %c0_i32_1 = arith.constant 0 : i32
    return %c0_i32, %c0_i32_0 : i32, i32
  }
  func.func @transform_10(%arg0: i32) -> (i32, i32) {
    %c0_i32 = arith.constant 0 : i32
    %c0_i32_0 = arith.constant 0 : i32
    %c0_i32_1 = arith.constant 0 : i32
    return %c0_i32, %c0_i32_0 : i32, i32
  }
  func.func @transform_11(%arg0: i32) -> (i32, i32) {
    %c0_i32 = arith.constant 0 : i32
    %c0_i32_0 = arith.constant 0 : i32
    %c0_i32_1 = arith.constant 0 : i32
    return %c0_i32, %c0_i32_0 : i32, i32
  }
  func.func @transform_12(%arg0: i32) -> (i32, i32) {
    %c0_i32 = arith.constant 0 : i32
    %c0_i32_0 = arith.constant 0 : i32
    %c0_i32_1 = arith.constant 0 : i32
    return %c0_i32, %c0_i32_0 : i32, i32
  }
  func.func @transform_13(%arg0: i32) -> (i32, i32) {
    %c0_i32 = arith.constant 0 : i32
    %c0_i32_0 = arith.constant 0 : i32
    %c0_i32_1 = arith.constant 0 : i32
    return %c0_i32, %c0_i32_0 : i32, i32
  }
  func.func @transform_14(%arg0: i32) -> (i32, i32) {
    %c0_i32 = arith.constant 0 : i32
    %c0_i32_0 = arith.constant 0 : i32
    %c0_i32_1 = arith.constant 0 : i32
    return %c0_i32, %c0_i32_0 : i32, i32
  }
  func.func @transform_15(%arg0: i32) -> (i32, i32) {
    %c0_i32 = arith.constant 0 : i32
    %c0_i32_0 = arith.constant 0 : i32
    return %arg0, %c0_i32 : i32, i32
  }
}

</mosaic_0001>

<llo_original>
// kernel: net_forward.1
$region0: #{net_forward.1}
  #allocation0 [shape = 'u32[]', space=smem, size = 0x4, offset = 0x4, fixed_abs, tag = 'smem constant byte address 0x4 - core index']
  #allocation1 [shape = 'u32[144,128]{1,0:T(1,128)}', space=vmem, size = 0x12000, scoped, tag = 'internal scratch']
  #allocation2 [shape = 'f32[1,1]{1,0:T(1,128)S(1)}', space=vmem, size = 0x200, scoped, tag = 'scoped memory for net_forward.1']
  %s0 = inlined_call_operand.vmem [shape: f32[8,16,6], index: 0, kind: input, shape index: {}]
  %s1 = inlined_call_operand.vmem [shape: f32[2,16,6], index: 1, kind: input, shape index: {}]
  %s2 = inlined_call_operand.vmem [shape: f32[6,128], index: 2, kind: input, shape index: {}]
  %s3 = inlined_call_operand.vmem [shape: f32[32,128], index: 3, kind: input, shape index: {}]
  %s4 = inlined_call_operand.vmem [shape: f32[1,128], index: 4, kind: input, shape index: {}]
  %s5 = inlined_call_operand.vmem [shape: f32[6,128], index: 5, kind: input, shape index: {}]
  %s6 = inlined_call_operand.vmem [shape: f32[32,128], index: 6, kind: input, shape index: {}]
  %s7 = inlined_call_operand.vmem [shape: f32[1,128], index: 7, kind: input, shape index: {}]
  %s8 = inlined_call_operand.vmem [shape: f32[32,32], index: 8, kind: input, shape index: {}]
  %s9 = inlined_call_operand.vmem [shape: f32[1,32], index: 9, kind: input, shape index: {}]
  %s10 = inlined_call_operand.vmem [shape: f32[32,32], index: 10, kind: input, shape index: {}]
  %s11 = inlined_call_operand.vmem [shape: f32[32,32], index: 11, kind: input, shape index: {}]
  %s12 = inlined_call_operand.vmem [shape: f32[1,32], index: 12, kind: input, shape index: {}]
  %s13 = inlined_call_operand.vmem [shape: f32[1,32], index: 13, kind: input, shape index: {}]
  %s14 = inlined_call_operand.<no memory space> [shape: f32[1,1], index: 14, kind: input, shape index: {}]
  %s15 = inlined_call_operand.vmem [shape: f32[16,2], index: 15, kind: output, shape index: {}]
  %s16 = sld [smem:[#allocation0]]
  $region169: #{net_forward.1} parent=0
    _
  %s18 = ssub.s32 1, %s16
  %s19 = scalar_select 0, %s18, %s16
  %v20 = vstv %s14
  %21 = vst [vmem:[#allocation2] sm:$0x1] %v20
  $region1: #{net_forward.1} parent=0
    #allocation3 [shape = 'u8[65536]{0}', space=vmem, size = 0x10000, scoped, tag = 'input window, operand 0']
    #allocation4 [shape = 'u8[16384]{0}', space=vmem, size = 0x4000, scoped, tag = 'input window, operand 1']
    loop: start=0, step=1, limit=4
    $region2: #{net_forward.1} parent=1 // loop_pre_header
      _
    $region3: #{net_forward.1} parent=1 // loop_header
      %s23 = sphi 0, %s27
      %p24 = scmp.ge.s32.totalorder %s23, 4
      %s33 = sphi 0, %s35
      %s36 = sphi 0, %s33
      %s37 = sphi 0, %s36
      %s53 = sphi 0, %s37
      %s59 = sphi 0, %s61
      %s62 = sphi 0, %s59
      %s63 = sphi 0, %s62
      %s79 = sphi 0, %s63
      %s83 = sphi 0, %s83
      %s85 = sphi 0, %s83
      %s86 = sphi 0, %s85
      %s100 = sphi 0, %s86
      %s104 = sphi 0, %s104
      %s106 = sphi 0, %s104
      %s107 = sphi 0, %s106
      %s121 = sphi 0, %s107
      %s125 = sphi 0, %s125
      %s127 = sphi 0, %s125
      %s128 = sphi 0, %s127
      %s142 = sphi 0, %s128
      %s146 = sphi 0, %s146
      %s148 = sphi 0, %s146
      %s149 = sphi 0, %s148
      %s163 = sphi 0, %s149
      %s167 = sphi 0, %s167
      %s169 = sphi 0, %s167
      %s170 = sphi 0, %s169
      %s184 = sphi 0, %s170
      %s188 = sphi 0, %s188
      %s190 = sphi 0, %s188
      %s191 = sphi 0, %s190
      %s205 = sphi 0, %s191
      %s209 = sphi 0, %s209
      %s211 = sphi 0, %s209
      %s212 = sphi 0, %s211
      %s226 = sphi 0, %s212
      %s230 = sphi 0, %s230
      %s232 = sphi 0, %s230
      %s233 = sphi 0, %s232
      %s247 = sphi 0, %s233
      %s251 = sphi 0, %s251
      %s253 = sphi 0, %s251
      %s254 = sphi 0, %s253
      %s268 = sphi 0, %s254
      %s272 = sphi 0, %s272
      %s274 = sphi 0, %s272
      %s275 = sphi 0, %s274
      %s289 = sphi 0, %s275
      %s293 = sphi 0, %s293
      %s295 = sphi 0, %s293
      %s296 = sphi 0, %s295
      %s310 = sphi 0, %s296
      %s314 = sphi 0, %s314
      %s316 = sphi 0, %s314
      %s317 = sphi 0, %s316
      %s331 = sphi 0, %s317
      %s335 = sphi 0, %s335
      %s337 = sphi 0, %s335
      %s338 = sphi 0, %s337
      %s352 = sphi 0, %s338
      %s358 = sphi 0, %s360
      %s361 = sphi 0, %s358
      %s362 = sphi 0, %s361
      %s378 = sphi 0, %s362
    $region4: #{net_forward.1} parent=1 // loop_header_branch
      %26 = sbr.rel (%p24) target = $region8
    $region5: #{net_forward.1} parent=1 // loop_body
      %s28 = ssub.s32 %s23, 1
      %s29 = ssub.s32 %s23, 2
      %s30 = sadd.s32 %s23, 1
      %s31 = ssub.s32 %s23, %s30
      %p32 = scmp.eq.s32.totalorder %s31, 0
      %s34 = sadd.s32 %s33, 1
      %s35 = scalar_select %p32, %s33, %s34
      %p38 = pneg %p32
      %p39 = scmp.eq.s32.totalorder %s23, 1
      %p40 = por %p38, %p39
      %p41 = scmp.ne.s32.totalorder %s33, %s36
      %p42 = scmp.eq.s32.totalorder %s23, 0
      %p43 = por %p41, %p42
      %p44 = scmp.ne.s32.totalorder %s33, %s36
      %p45 = scmp.eq.s32.totalorder %s28, 1
      %p46 = por %p44, %p45
      %p47 = scmp.ne.s32.totalorder %s36, %s37
      %p48 = scmp.eq.s32.totalorder %s28, 0
      %p49 = por %p47, %p48
      %p50 = scmp.ne.s32.totalorder %s36, %s37
      %p51 = scmp.eq.s32.totalorder %s29, 1
      %p52 = por %p50, %p51
      %p54 = scmp.ne.s32.totalorder %s37, %s53
      %p55 = scmp.eq.s32.totalorder %s29, 0
      %p56 = por %p54, %p55
      %s57 = ssub.s32 %s23, %s30
      %p58 = scmp.eq.s32.totalorder %s57, 0
      %s60 = sadd.s32 %s59, 1
      %s61 = scalar_select %p58, %s59, %s60
      %p64 = pneg %p58
      %p65 = scmp.eq.s32.totalorder %s23, 1
      %p66 = por %p64, %p65
      %p67 = scmp.ne.s32.totalorder %s59, %s62
      %p68 = scmp.eq.s32.totalorder %s23, 0
      %p69 = por %p67, %p68
      %p70 = scmp.ne.s32.totalorder %s59, %s62
      %p71 = scmp.eq.s32.totalorder %s28, 1
      %p72 = por %p70, %p71
      %p73 = scmp.ne.s32.totalorder %s62, %s63
      %p74 = scmp.eq.s32.totalorder %s28, 0
      %p75 = por %p73, %p74
      %p76 = scmp.ne.s32.totalorder %s62, %s63
      %p77 = scmp.eq.s32.totalorder %s29, 1
      %p78 = por %p76, %p77
      %p80 = scmp.ne.s32.totalorder %s63, %s79
      %p81 = scmp.eq.s32.totalorder %s29, 0
      %p82 = por %p80, %p81
      %s84 = sadd.s32 %s83, 1
      %p87 = scmp.eq.s32.totalorder %s23, 1
      %p88 = scmp.ne.s32.totalorder %s83, %s85
      %p89 = scmp.eq.s32.totalorder %s23, 0
      %p90 = por %p88, %p89
      %p91 = scmp.ne.s32.totalorder %s83, %s85
      %p92 = scmp.eq.s32.totalorder %s28, 1
      %p93 = por %p91, %p92
      %p94 = scmp.ne.s32.totalorder %s85, %s86
      %p95 = scmp.eq.s32.totalorder %s28, 0
      %p96 = por %p94, %p95
      %p97 = scmp.ne.s32.totalorder %s85, %s86
      %p98 = scmp.eq.s32.totalorder %s29, 1
      %p99 = por %p97, %p98
      %p101 = scmp.ne.s32.totalorder %s86, %s100
      %p102 = scmp.eq.s32.totalorder %s29, 0
      %p103 = por %p101, %p102
      %s105 = sadd.s32 %s104, 1
      %p108 = scmp.eq.s32.totalorder %s23, 1
      %p109 = scmp.ne.s32.totalorder %s104, %s106
      %p110 = scmp.eq.s32.totalorder %s23, 0
      %p111 = por %p109, %p110
      %p112 = scmp.ne.s32.totalorder %s104, %s106
      %p113 = scmp.eq.s32.totalorder %s28, 1
      %p114 = por %p112, %p113
      %p115 = scmp.ne.s32.totalorder %s106, %s107
      %p116 = scmp.eq.s32.totalorder %s28, 0
      %p117 = por %p115, %p116
      %p118 = scmp.ne.s32.totalorder %s106, %s107
      %p119 = scmp.eq.s32.totalorder %s29, 1
      %p120 = por %p118, %p119
      %p122 = scmp.ne.s32.totalorder %s107, %s121
      %p123 = scmp.eq.s32.totalorder %s29, 0
      %p124 = por %p122, %p123
      %s126 = sadd.s32 %s125, 1
      %p129 = scmp.eq.s32.totalorder %s23, 1
      %p130 = scmp.ne.s32.totalorder %s125, %s127
      %p131 = scmp.eq.s32.totalorder %s23, 0
      %p132 = por %p130, %p131
      %p133 = scmp.ne.s32.totalorder %s125, %s127
      %p134 = scmp.eq.s32.totalorder %s28, 1
      %p135 = por %p133, %p134
      %p136 = scmp.ne.s32.totalorder %s127, %s128
      %p137 = scmp.eq.s32.totalorder %s28, 0
      %p138 = por %p136, %p137
      %p139 = scmp.ne.s32.totalorder %s127, %s128
      %p140 = scmp.eq.s32.totalorder %s29, 1
      %p141 = por %p139, %p140
      %p143 = scmp.ne.s32.totalorder %s128, %s142
      %p144 = scmp.eq.s32.totalorder %s29, 0
      %p145 = por %p143, %p144
      %s147 = sadd.s32 %s146, 1
      %p150 = scmp.eq.s32.totalorder %s23, 1
      %p151 = scmp.ne.s32.totalorder %s146, %s148
      %p152 = scmp.eq.s32.totalorder %s23, 0
      %p153 = por %p151, %p152
      %p154 = scmp.ne.s32.totalorder %s146, %s148
      %p155 = scmp.eq.s32.totalorder %s28, 1
      %p156 = por %p154, %p155
      %p157 = scmp.ne.s32.totalorder %s148, %s149
      %p158 = scmp.eq.s32.totalorder %s28, 0
      %p159 = por %p157, %p158
      %p160 = scmp.ne.s32.totalorder %s148, %s149
      %p161 = scmp.eq.s32.totalorder %s29, 1
      %p162 = por %p160, %p161
      %p164 = scmp.ne.s32.totalorder %s149, %s163
      %p165 = scmp.eq.s32.totalorder %s29, 0
      %p166 = por %p164, %p165
      %s168 = sadd.s32 %s167, 1
      %p171 = scmp.eq.s32.totalorder %s23, 1
      %p172 = scmp.ne.s32.totalorder %s167, %s169
      %p173 = scmp.eq.s32.totalorder %s23, 0
      %p174 = por %p172, %p173
      %p175 = scmp.ne.s32.totalorder %s167, %s169
      %p176 = scmp.eq.s32.totalorder %s28, 1
      %p177 = por %p175, %p176
      %p178 = scmp.ne.s32.totalorder %s169, %s170
      %p179 = scmp.eq.s32.totalorder %s28, 0
      %p180 = por %p178, %p179
      %p181 = scmp.ne.s32.totalorder %s169, %s170
      %p182 = scmp.eq.s32.totalorder %s29, 1
      %p183 = por %p181, %p182
      %p185 = scmp.ne.s32.totalorder %s170, %s184
      %p186 = scmp.eq.s32.totalorder %s29, 0
      %p187 = por %p185, %p186
      %s189 = sadd.s32 %s188, 1
      %p192 = scmp.eq.s32.totalorder %s23, 1
      %p193 = scmp.ne.s32.totalorder %s188, %s190
      %p194 = scmp.eq.s32.totalorder %s23, 0
      %p195 = por %p193, %p194
      %p196 = scmp.ne.s32.totalorder %s188, %s190
      %p197 = scmp.eq.s32.totalorder %s28, 1
      %p198 = por %p196, %p197
      %p199 = scmp.ne.s32.totalorder %s190, %s191
      %p200 = scmp.eq.s32.totalorder %s28, 0
      %p201 = por %p199, %p200
      %p202 = scmp.ne.s32.totalorder %s190, %s191
      %p203 = scmp.eq.s32.totalorder %s29, 1
      %p204 = por %p202, %p203
      %p206 = scmp.ne.s32.totalorder %s191, %s205
      %p207 = scmp.eq.s32.totalorder %s29, 0
      %p208 = por %p206, %p207
      %s210 = sadd.s32 %s209, 1
      %p213 = scmp.eq.s32.totalorder %s23, 1
      %p214 = scmp.ne.s32.totalorder %s209, %s211
      %p215 = scmp.eq.s32.totalorder %s23, 0
      %p216 = por %p214, %p215
      %p217 = scmp.ne.s32.totalorder %s209, %s211
      %p218 = scmp.eq.s32.totalorder %s28, 1
      %p219 = por %p217, %p218
      %p220 = scmp.ne.s32.totalorder %s211, %s212
      %p221 = scmp.eq.s32.totalorder %s28, 0
      %p222 = por %p220, %p221
      %p223 = scmp.ne.s32.totalorder %s211, %s212
      %p224 = scmp.eq.s32.totalorder %s29, 1
      %p225 = por %p223, %p224
      %p227 = scmp.ne.s32.totalorder %s212, %s226
      %p228 = scmp.eq.s32.totalorder %s29, 0
      %p229 = por %p227, %p228
      %s231 = sadd.s32 %s230, 1
      %p234 = scmp.eq.s32.totalorder %s23, 1
      %p235 = scmp.ne.s32.totalorder %s230, %s232
      %p236 = scmp.eq.s32.totalorder %s23, 0
      %p237 = por %p235, %p236
      %p238 = scmp.ne.s32.totalorder %s230, %s232
      %p239 = scmp.eq.s32.totalorder %s28, 1
      %p240 = por %p238, %p239
      %p241 = scmp.ne.s32.totalorder %s232, %s233
      %p242 = scmp.eq.s32.totalorder %s28, 0
      %p243 = por %p241, %p242
      %p244 = scmp.ne.s32.totalorder %s232, %s233
      %p245 = scmp.eq.s32.totalorder %s29, 1
      %p246 = por %p244, %p245
      %p248 = scmp.ne.s32.totalorder %s233, %s247
      %p249 = scmp.eq.s32.totalorder %s29, 0
      %p250 = por %p248, %p249
      %s252 = sadd.s32 %s251, 1
      %p255 = scmp.eq.s32.totalorder %s23, 1
      %p256 = scmp.ne.s32.totalorder %s251, %s253
      %p257 = scmp.eq.s32.totalorder %s23, 0
      %p258 = por %p256, %p257
      %p259 = scmp.ne.s32.totalorder %s251, %s253
      %p260 = scmp.eq.s32.totalorder %s28, 1
      %p261 = por %p259, %p260
      %p262 = scmp.ne.s32.totalorder %s253, %s254
      %p263 = scmp.eq.s32.totalorder %s28, 0
      %p264 = por %p262, %p263
      %p265 = scmp.ne.s32.totalorder %s253, %s254
      %p266 = scmp.eq.s32.totalorder %s29, 1
      %p267 = por %p265, %p266
      %p269 = scmp.ne.s32.totalorder %s254, %s268
      %p270 = scmp.eq.s32.totalorder %s29, 0
      %p271 = por %p269, %p270
      %s273 = sadd.s32 %s272, 1
      %p276 = scmp.eq.s32.totalorder %s23, 1
      %p277 = scmp.ne.s32.totalorder %s272, %s274
      %p278 = scmp.eq.s32.totalorder %s23, 0
      %p279 = por %p277, %p278
      %p280 = scmp.ne.s32.totalorder %s272, %s274
      %p281 = scmp.eq.s32.totalorder %s28, 1
      %p282 = por %p280, %p281
      %p283 = scmp.ne.s32.totalorder %s274, %s275
      %p284 = scmp.eq.s32.totalorder %s28, 0
      %p285 = por %p283, %p284
      %p286 = scmp.ne.s32.totalorder %s274, %s275
      %p287 = scmp.eq.s32.totalorder %s29, 1
      %p288 = por %p286, %p287
      %p290 = scmp.ne.s32.totalorder %s275, %s289
      %p291 = scmp.eq.s32.totalorder %s29, 0
      %p292 = por %p290, %p291
      %s294 = sadd.s32 %s293, 1
      %p297 = scmp.eq.s32.totalorder %s23, 1
      %p298 = scmp.ne.s32.totalorder %s293, %s295
      %p299 = scmp.eq.s32.totalorder %s23, 0
      %p300 = por %p298, %p299
      %p301 = scmp.ne.s32.totalorder %s293, %s295
      %p302 = scmp.eq.s32.totalorder %s28, 1
      %p303 = por %p301, %p302
      %p304 = scmp.ne.s32.totalorder %s295, %s296
      %p305 = scmp.eq.s32.totalorder %s28, 0
      %p306 = por %p304, %p305
      %p307 = scmp.ne.s32.totalorder %s295, %s296
      %p308 = scmp.eq.s32.totalorder %s29, 1
      %p309 = por %p307, %p308
      %p311 = scmp.ne.s32.totalorder %s296, %s310
      %p312 = scmp.eq.s32.totalorder %s29, 0
      %p313 = por %p311, %p312
      %s315 = sadd.s32 %s314, 1
      %p318 = scmp.eq.s32.totalorder %s23, 1
      %p319 = scmp.ne.s32.totalorder %s314, %s316
      %p320 = scmp.eq.s32.totalorder %s23, 0
      %p321 = por %p319, %p320
      %p322 = scmp.ne.s32.totalorder %s314, %s316
      %p323 = scmp.eq.s32.totalorder %s28, 1
      %p324 = por %p322, %p323
      %p325 = scmp.ne.s32.totalorder %s316, %s317
      %p326 = scmp.eq.s32.totalorder %s28, 0
      %p327 = por %p325, %p326
      %p328 = scmp.ne.s32.totalorder %s316, %s317
      %p329 = scmp.eq.s32.totalorder %s29, 1
      %p330 = por %p328, %p329
      %p332 = scmp.ne.s32.totalorder %s317, %s331
      %p333 = scmp.eq.s32.totalorder %s29, 0
      %p334 = por %p332, %p333
      %s336 = sadd.s32 %s335, 1
      %p339 = scmp.eq.s32.totalorder %s23, 1
      %p340 = scmp.ne.s32.totalorder %s335, %s337
      %p341 = scmp.eq.s32.totalorder %s23, 0
      %p342 = por %p340, %p341
      %p343 = scmp.ne.s32.totalorder %s335, %s337
      %p344 = scmp.eq.s32.totalorder %s28, 1
      %p345 = por %p343, %p344
      %p346 = scmp.ne.s32.totalorder %s337, %s338
      %p347 = scmp.eq.s32.totalorder %s28, 0
      %p348 = por %p346, %p347
      %p349 = scmp.ne.s32.totalorder %s337, %s338
      %p350 = scmp.eq.s32.totalorder %s29, 1
      %p351 = por %p349, %p350
      %p353 = scmp.ne.s32.totalorder %s338, %s352
      %p354 = scmp.eq.s32.totalorder %s29, 0
      %p355 = por %p353, %p354
      %s356 = ssub.s32 %s23, %s30
      %p357 = scmp.eq.s32.totalorder %s356, 0
      %s359 = sadd.s32 %s358, 1
      %s360 = scalar_select %p357, %s358, %s359
      %p363 = pneg %p357
      %p364 = scmp.eq.s32.totalorder %s23, 1
      %p365 = por %p363, %p364
      %p366 = scmp.ne.s32.totalorder %s358, %s361
      %p367 = scmp.eq.s32.totalorder %s23, 0
      %p368 = por %p366, %p367
      %p369 = scmp.ne.s32.totalorder %s358, %s361
      %p370 = scmp.eq.s32.totalorder %s28, 1
      %p371 = por %p369, %p370
      %p372 = scmp.ne.s32.totalorder %s361, %s362
      %p373 = scmp.eq.s32.totalorder %s28, 0
      %p374 = por %p372, %p373
      %p375 = scmp.ne.s32.totalorder %s361, %s362
      %p376 = scmp.eq.s32.totalorder %s29, 1
      %p377 = por %p375, %p376
      %p379 = scmp.ne.s32.totalorder %s362, %s378
      %p380 = scmp.eq.s32.totalorder %s29, 0
      %p381 = por %p379, %p380
      %p382 = scmp.le.s32.totalorder 1, %s23
      %p383 = scmp.lt.s32.totalorder %s23, 3
      %p384 = pnand %p382, %p383
      %p385 = pneg %p384
      // Predicated region
      $region9: #{net_forward.1} parent=5 // pred_check
        _
      $region10: #{net_forward.1} parent=5 // pred_check_branch
        %387 = sbr.rel (%p384) target = $region12
      $region11: #{net_forward.1} parent=5 // pred_region
        %s388 = ssub.s32 %s23, 1
        // Predicated region
        $region13: #{net_forward.1} parent=11 // pred_check
          %p389 = pneg %p96
        $region14: #{net_forward.1} parent=11 // pred_check_branch
          %391 = sbr.rel (%p389) target = $region16
        $region15: #{net_forward.1} parent=11 // pred_region
          _
        $region16: #{net_forward.1} parent=11 // pred_fallthru
          _
        // Predicated region
        $region17: #{net_forward.1} parent=11 // pred_check
          %p392 = pneg %p117
        $region18: #{net_forward.1} parent=11 // pred_check_branch
          %394 = sbr.rel (%p392) target = $region20
        $region19: #{net_forward.1} parent=11 // pred_region
          _
        $region20: #{net_forward.1} parent=11 // pred_fallthru
          _
        // Predicated region
        $region21: #{net_forward.1} parent=11 // pred_check
          %p395 = pneg %p138
        $region22: #{net_forward.1} parent=11 // pred_check_branch
          %397 = sbr.rel (%p395) target = $region24
        $region23: #{net_forward.1} parent=11 // pred_region
          _
        $region24: #{net_forward.1} parent=11 // pred_fallthru
          _
        // Predicated region
        $region25: #{net_forward.1} parent=11 // pred_check
          %p398 = pneg %p159
        $region26: #{net_forward.1} parent=11 // pred_check_branch
          %400 = sbr.rel (%p398) target = $region28
        $region27: #{net_forward.1} parent=11 // pred_region
          _
        $region28: #{net_forward.1} parent=11 // pred_fallthru
          _
        // Predicated region
        $region29: #{net_forward.1} parent=11 // pred_check
          %p401 = pneg %p180
        $region30: #{net_forward.1} parent=11 // pred_check_branch
          %403 = sbr.rel (%p401) target = $region32
        $region31: #{net_forward.1} parent=11 // pred_region
          _
        $region32: #{net_forward.1} parent=11 // pred_fallthru
          _
        // Predicated region
        $region33: #{net_forward.1} parent=11 // pred_check
          %p404 = pneg %p201
        $region34: #{net_forward.1} parent=11 // pred_check_branch
          %406 = sbr.rel (%p404) target = $region36
        $region35: #{net_forward.1} parent=11 // pred_region
          _
        $region36: #{net_forward.1} parent=11 // pred_fallthru
          _
        // Predicated region
        $region37: #{net_forward.1} parent=11 // pred_check
          %p407 = pneg %p222
        $region38: #{net_forward.1} parent=11 // pred_check_branch
          %409 = sbr.rel (%p407) target = $region40
        $region39: #{net_forward.1} parent=11 // pred_region
          _
        $region40: #{net_forward.1} parent=11 // pred_fallthru
          _
        // Predicated region
        $region41: #{net_forward.1} parent=11 // pred_check
          %p410 = pneg %p243
        $region42: #{net_forward.1} parent=11 // pred_check_branch
          %412 = sbr.rel (%p410) target = $region44
        $region43: #{net_forward.1} parent=11 // pred_region
          _
        $region44: #{net_forward.1} parent=11 // pred_fallthru
          _
        // Predicated region
        $region45: #{net_forward.1} parent=11 // pred_check
          %p413 = pneg %p264
        $region46: #{net_forward.1} parent=11 // pred_check_branch
          %415 = sbr.rel (%p413) target = $region48
        $region47: #{net_forward.1} parent=11 // pred_region
          _
        $region48: #{net_forward.1} parent=11 // pred_fallthru
          _
        // Predicated region
        $region49: #{net_forward.1} parent=11 // pred_check
          %p416 = pneg %p285
        $region50: #{net_forward.1} parent=11 // pred_check_branch
          %418 = sbr.rel (%p416) target = $region52
        $region51: #{net_forward.1} parent=11 // pred_region
          _
        $region52: #{net_forward.1} parent=11 // pred_fallthru
          _
        // Predicated region
        $region53: #{net_forward.1} parent=11 // pred_check
          %p419 = pneg %p306
        $region54: #{net_forward.1} parent=11 // pred_check_branch
          %421 = sbr.rel (%p419) target = $region56
        $region55: #{net_forward.1} parent=11 // pred_region
          _
        $region56: #{net_forward.1} parent=11 // pred_fallthru
          _
        // Predicated region
        $region57: #{net_forward.1} parent=11 // pred_check
          %p422 = pneg %p327
        $region58: #{net_forward.1} parent=11 // pred_check_branch
          %424 = sbr.rel (%p422) target = $region60
        $region59: #{net_forward.1} parent=11 // pred_region
          _
        $region60: #{net_forward.1} parent=11 // pred_fallthru
          _
        // Predicated region
        $region61: #{net_forward.1} parent=11 // pred_check
          %p425 = pneg %p348
        $region62: #{net_forward.1} parent=11 // pred_check_branch
          %427 = sbr.rel (%p425) target = $region64
        $region63: #{net_forward.1} parent=11 // pred_region
          _
        $region64: #{net_forward.1} parent=11 // pred_fallthru
          _
      $region12: #{net_forward.1} parent=5 // pred_fallthru
        _
      %p428 = scmp.lt.s32.totalorder %s23, 2
      // Predicated region
      $region65: #{net_forward.1} parent=5 // pred_check
        %p429 = pneg %p428
      $region66: #{net_forward.1} parent=5 // pred_check_branch
        %431 = sbr.rel (%p429) target = $region68
      $region67: #{net_forward.1} parent=5 // pred_region
        // Predicated region
        $region69: #{net_forward.1} parent=67 // pred_check
          %p432 = pneg %p43
        $region70: #{net_forward.1} parent=67 // pred_check_branch
          %434 = sbr.rel (%p432) target = $region72
        $region71: #{net_forward.1} parent=67 // pred_region
          %s435 = sand.u32 %s33, 1
          %s436 = sand.u32 %s33, 1
          %s437 = smul.addr %s436, 64
          %s438 = scalar_lea.vmem [#allocation3], %s437
          %s439 = smul.addr %s23, 8
          %s440 = scalar_lea.vmem %s0, %s439
          // Predicated region
          $region73: #{net_forward.1} parent=71 // pred_check
            _
          $region74: #{net_forward.1} parent=71 // pred_check_branch
            %442 = sbr.rel (0) target = $region76
          $region75: #{net_forward.1} parent=71 // pred_region
            // Predicated region
            $region77: #{net_forward.1} parent=75 // pred_check
              _
            $region78: #{net_forward.1} parent=75 // pred_check_branch
              %444 = sbr.rel (0) target = $region80
            $region79: #{net_forward.1} parent=75 // pred_region
              // Predicated region
              $region92: #{net_forward.1} parent=79 // pred_check
                _
              $region93: #{net_forward.1} parent=79 // pred_check_branch
                %473 = sbr.rel (0) target = $region95
              $region94: #{net_forward.1} parent=79 // pred_region
                loop: start=0, step=1, limit=1
                $region96: #{net_forward.1} parent=94 // loop_pre_header
                  _
                $region97: #{net_forward.1} parent=94 // loop_header
                  %s475 = sphi 0, %s479
                  %p476 = scmp.ge.s32.totalorder %s475, 1
                  %s480 = sphi %s440, %s440
                  %s481 = sphi %s438, %s438
                $region98: #{net_forward.1} parent=94 // loop_header_branch
                  %478 = sbr.rel (%p476) target = $region102
                $region99: #{net_forward.1} parent=94 // loop_body
                  %v482 = vld [vmem:[%s480] sm:$0xff]
                  %483 = vst [vmem:[%s481] sm:$0xff] %v482
                  %v484 = vld [vmem:[%s480 + $0x10] sm:$0xff]
                  %485 = vst [vmem:[%s481 + $0x8] sm:$0xff] %v484
                  %v486 = vld [vmem:[%s480 + $0x20] sm:$0xff]
                  %487 = vst [vmem:[%s481 + $0x10] sm:$0xff] %v486
                  %v488 = vld [vmem:[%s480 + $0x30] sm:$0xff]
                  %489 = vst [vmem:[%s481 + $0x18] sm:$0xff] %v488
                  %v490 = vld [vmem:[%s480 + $0x40] sm:$0xff]
                  %491 = vst [vmem:[%s481 + $0x20] sm:$0xff] %v490
                  %v492 = vld [vmem:[%s480 + $0x50] sm:$0xff]
                  %493 = vst [vmem:[%s481 + $0x28] sm:$0xff] %v492
                  %v494 = vld [vmem:[%s480 + $0x60] sm:$0xff]
                  %495 = vst [vmem:[%s481 + $0x30] sm:$0xff] %v494
                  %v496 = vld [vmem:[%s480 + $0x70] sm:$0xff]
                  %497 = vst [vmem:[%s481 + $0x38] sm:$0xff] %v496
                $region100: #{net_forward.1} parent=94 // loop_footer
                  %s479 = sadd.s32 1, %s475
                $region101: #{net_forward.1} parent=94 // loop_footer_branch
                  %474 = sbr.rel target = $region97
                $region102: #{net_forward.1} parent=94 // loop_exit
                  _
              $region95: #{net_forward.1} parent=79 // pred_fallthru
                _
              // Predicated region
              $region103: #{net_forward.1} parent=79 // pred_check
                _
              $region104: #{net_forward.1} parent=79 // pred_check_branch
                %499 = sbr.rel target = $region106
              $region105: #{net_forward.1} parent=79 // pred_region
                _
              $region106: #{net_forward.1} parent=79 // pred_fallthru
                _
            $region80: #{net_forward.1} parent=75 // pred_fallthru
              _
            // Predicated region
            $region81: #{net_forward.1} parent=75 // pred_check
              _
            $region82: #{net_forward.1} parent=75 // pred_check_branch
              %446 = sbr.rel target = $region84
            $region83: #{net_forward.1} parent=75 // pred_region
              loop: start=0, step=1, limit=1
              $region85: #{net_forward.1} parent=83 // loop_pre_header
                _
              $region86: #{net_forward.1} parent=83 // loop_header
                %s449 = sphi 0, %s453
                %p450 = scmp.ge.s32.totalorder %s449, 1
                %s454 = sphi %s440, %s440
                %s455 = sphi %s438, %s438
              $region87: #{net_forward.1} parent=83 // loop_header_branch
                %452 = sbr.rel (%p450) target = $region91
              $region88: #{net_forward.1} parent=83 // loop_body
                %v456 = vld [vmem:[%s454] sm:$0xff]
                %457 = vst [vmem:[%s455] sm:$0xff] %v456
                %v458 = vld [vmem:[%s454 + $0x10] sm:$0xff]
                %459 = vst [vmem:[%s455 + $0x8] sm:$0xff] %v458
                %v460 = vld [vmem:[%s454 + $0x20] sm:$0xff]
                %461 = vst [vmem:[%s455 + $0x10] sm:$0xff] %v460
                %v462 = vld [vmem:[%s454 + $0x30] sm:$0xff]
                %463 = vst [vmem:[%s455 + $0x18] sm:$0xff] %v462
                %v464 = vld [vmem:[%s454 + $0x40] sm:$0xff]
                %465 = vst [vmem:[%s455 + $0x20] sm:$0xff] %v464
                %v466 = vld [vmem:[%s454 + $0x50] sm:$0xff]
                %467 = vst [vmem:[%s455 + $0x28] sm:$0xff] %v466
                %v468 = vld [vmem:[%s454 + $0x60] sm:$0xff]
                %469 = vst [vmem:[%s455 + $0x30] sm:$0xff] %v468
                %v470 = vld [vmem:[%s454 + $0x70] sm:$0xff]
                %471 = vst [vmem:[%s455 + $0x38] sm:$0xff] %v470
              $region89: #{net_forward.1} parent=83 // loop_footer
                %s453 = sadd.s32 1, %s449
              $region90: #{net_forward.1} parent=83 // loop_footer_branch
                %448 = sbr.rel target = $region86
              $region91: #{net_forward.1} parent=83 // loop_exit
                _
            $region84: #{net_forward.1} parent=75 // pred_fallthru
              _
          $region76: #{net_forward.1} parent=71 // pred_fallthru
            _
          %500 = vnop
        $region72: #{net_forward.1} parent=67 // pred_fallthru
          _
        // Predicated region
        $region107: #{net_forward.1} parent=67 // pred_check
          %p501 = pneg %p69
        $region108: #{net_forward.1} parent=67 // pred_check_branch
          %503 = sbr.rel (%p501) target = $region110
        $region109: #{net_forward.1} parent=67 // pred_region
          %s504 = sand.u32 %s59, 1
          %s505 = sand.u32 %s59, 1
          %s506 = smul.addr %s505, 16
          %s507 = scalar_lea.vmem [#allocation4], %s506
          %s508 = smul.addr %s23, 8
          %s509 = scalar_lea.vmem %s1, %s508
          // Predicated region
          $region111: #{net_forward.1} parent=109 // pred_check
            _
          $region112: #{net_forward.1} parent=109 // pred_check_branch
            %511 = sbr.rel (0) target = $region114
          $region113: #{net_forward.1} parent=109 // pred_region
            // Predicated region
            $region115: #{net_forward.1} parent=113 // pred_check
              _
            $region116: #{net_forward.1} parent=113 // pred_check_branch
              %513 = sbr.rel (0) target = $region118
            $region117: #{net_forward.1} parent=113 // pred_region
              // Predicated region
              $region130: #{net_forward.1} parent=117 // pred_check
                _
              $region131: #{net_forward.1} parent=117 // pred_check_branch
                %530 = sbr.rel (0) target = $region133
              $region132: #{net_forward.1} parent=117 // pred_region
                loop: start=0, step=1, limit=1
                $region134: #{net_forward.1} parent=132 // loop_pre_header
                  _
                $region135: #{net_forward.1} parent=132 // loop_header
                  %s532 = sphi 0, %s536
                  %p533 = scmp.ge.s32.totalorder %s532, 1
                  %s537 = sphi %s509, %s509
                  %s538 = sphi %s507, %s507
                $region136: #{net_forward.1} parent=132 // loop_header_branch
                  %535 = sbr.rel (%p533) target = $region140
                $region137: #{net_forward.1} parent=132 // loop_body
                  %v539 = vld [vmem:[%s537] sm:$0xff]
                  %540 = vst [vmem:[%s538] sm:$0xff] %v539
                  %v541 = vld [vmem:[%s537 + $0x10] sm:$0xff]
                  %542 = vst [vmem:[%s538 + $0x8] sm:$0xff] %v541
                $region138: #{net_forward.1} parent=132 // loop_footer
                  %s536 = sadd.s32 1, %s532
                $region139: #{net_forward.1} parent=132 // loop_footer_branch
                  %531 = sbr.rel target = $region135
                $region140: #{net_forward.1} parent=132 // loop_exit
                  _
              $region133: #{net_forward.1} parent=117 // pred_fallthru
                _
              // Predicated region
              $region141: #{net_forward.1} parent=117 // pred_check
                _
              $region142: #{net_forward.1} parent=117 // pred_check_branch
                %544 = sbr.rel target = $region144
              $region143: #{net_forward.1} parent=117 // pred_region
                _
              $region144: #{net_forward.1} parent=117 // pred_fallthru
                _
            $region118: #{net_forward.1} parent=113 // pred_fallthru
              _
            // Predicated region
            $region119: #{net_forward.1} parent=113 // pred_check
              _
            $region120: #{net_forward.1} parent=113 // pred_check_branch
              %515 = sbr.rel target = $region122
            $region121: #{net_forward.1} parent=113 // pred_region
              loop: start=0, step=1, limit=1
              $region123: #{net_forward.1} parent=121 // loop_pre_header
                _
              $region124: #{net_forward.1} parent=121 // loop_header
                %s518 = sphi 0, %s522
                %p519 = scmp.ge.s32.totalorder %s518, 1
                %s523 = sphi %s509, %s509
                %s524 = sphi %s507, %s507
              $region125: #{net_forward.1} parent=121 // loop_header_branch
                %521 = sbr.rel (%p519) target = $region129
              $region126: #{net_forward.1} parent=121 // loop_body
                %v525 = vld [vmem:[%s523] sm:$0xff]
                %526 = vst [vmem:[%s524] sm:$0xff] %v525
                %v527 = vld [vmem:[%s523 + $0x10] sm:$0xff]
                %528 = vst [vmem:[%s524 + $0x8] sm:$0xff] %v527
              $region127: #{net_forward.1} parent=121 // loop_footer
                %s522 = sadd.s32 1, %s518
              $region128: #{net_forward.1} parent=121 // loop_footer_branch
                %517 = sbr.rel target = $region124
              $region129: #{net_forward.1} parent=121 // loop_exit
                _
            $region122: #{net_forward.1} parent=113 // pred_fallthru
              _
          $region114: #{net_forward.1} parent=109 // pred_fallthru
            _
          %545 = vnop
        $region110: #{net_forward.1} parent=67 // pred_fallthru
          _
      $region68: #{net_forward.1} parent=5 // pred_fallthru
        _
      %p546 = scmp.le.s32.totalorder 1, %s23
      %p547 = scmp.lt.s32.totalorder %s23, 3
      %p548 = pnand %p546, %p547
      %p549 = pneg %p548
      // Predicated region
      $region145: #{net_forward.1} parent=5 // pred_check
        _
      $region146: #{net_forward.1} parent=5 // pred_check_branch
        %551 = sbr.rel (%p548) target = $region148
      $region147: #{net_forward.1} parent=5 // pred_region
        %s552 = ssub.s32 %s23, 1
        %s553 = sand.u32 %s36, 1
        %s554 = sand.u32 %s36, 1
        %s555 = smul.addr %s554, 64
        %s556 = scalar_lea.vmem [#allocation3], %s555
        // Predicated region
        $region149: #{net_forward.1} parent=147 // pred_check
          %p557 = pneg %p49
        $region150: #{net_forward.1} parent=147 // pred_check_branch
          %559 = sbr.rel (%p557) target = $region152
        $region151: #{net_forward.1} parent=147 // pred_region
          _
        $region152: #{net_forward.1} parent=147 // pred_fallthru
          _
        %s560 = sand.u32 %s62, 1
        %s561 = sand.u32 %s62, 1
        %s562 = smul.addr %s561, 16
        %s563 = scalar_lea.vmem [#allocation4], %s562
        // Predicated region
        $region153: #{net_forward.1} parent=147 // pred_check
          %p564 = pneg %p75
        $region154: #{net_forward.1} parent=147 // pred_check_branch
          %566 = sbr.rel (%p564) target = $region156
        $region155: #{net_forward.1} parent=147 // pred_region
          _
        $region156: #{net_forward.1} parent=147 // pred_fallthru
          _
        %s567 = sand.u32 %s36, 1
        %s568 = sand.u32 %s36, 1
        %s569 = smul.addr %s568, 64
        %s570 = scalar_lea.vmem [#allocation3], %s569
        %p571 = pneg %p49
        %p572 = pneg %p46
        %s573 = sand.u32 %s62, 1
        %s574 = sand.u32 %s62, 1
        %s575 = smul.addr %s574, 16
        %s576 = scalar_lea.vmem [#allocation4], %s575
        %p577 = pneg %p75
        %p578 = pneg %p72
        %p579 = pneg %p96
        %p580 = pneg %p93
        %p581 = pneg %p117
        %p582 = pneg %p114
        %p583 = pneg %p138
        %p584 = pneg %p135
        %p585 = pneg %p159
        %p586 = pneg %p156
        %p587 = pneg %p180
        %p588 = pneg %p177
        %p589 = pneg %p201
        %p590 = pneg %p198
        %p591 = pneg %p222
        %p592 = pneg %p219
        %p593 = pneg %p243
        %p594 = pneg %p240
        %p595 = pneg %p264
        %p596 = pneg %p261
        %p597 = pneg %p285
        %p598 = pneg %p282
        %p599 = pneg %p306
        %p600 = pneg %p303
        %p601 = pneg %p327
        %p602 = pneg %p324
        %p603 = pneg %p348
        %p604 = pneg %p345
        %p605 = pneg %p374
        %p606 = pneg %p371
        %p607 = scmp.lt.s32.totalorder %s28, 1
        %s608 = scalar_select %p607, %s28, 1
        %s609 = smul.addr %s608, 8
        %s610 = scalar_lea.vmem %s15, %s609
        %p611 = scmp.lt.s32.totalorder %s28, 1
        %s612 = scalar_select %p611, %s28, 1
        %s613 = smul.addr %s612, 8
        %s614 = scalar_lea.vmem %s15, %s613
        %v615 = vld [vmem:[%s2] sm:$0x3f]
        %v616 = vld [vmem:[%s3] sm:$0xff]
        %v617 = vld [vmem:[%s3 + $0x8] sm:$0xff]
        %v618 = vld [vmem:[%s3 + $0x10] sm:$0xff]
        %v619 = vld [vmem:[%s3 + $0x18] sm:$0xff]
        %v620 = vld [vmem:[%s4] sm:$0x1]
        %v621 = vld [vmem:[%s5] sm:$0x3f]
        %v622 = vld [vmem:[%s6] sm:$0xff]
        %v623 = vld [vmem:[%s6 + $0x8] sm:$0xff]
        %v624 = vld [vmem:[%s6 + $0x10] sm:$0xff]
        %v625 = vld [vmem:[%s6 + $0x18] sm:$0xff]
        %v626 = vld [vmem:[%s7] sm:$0x1]
        %v627 = vld [vmem:[%s13] sm:$0x1]
        %v628 = vld [vmem:[#allocation2] sm:$0x1]
        %v629 = vld [vmem:[%s556] sm:$0xff]
        %vm630 = vcmask 261120
        %v632 = vsel %vm630, 0.0, 0
        %634 = vmatprep.subr.mxu0 0.0
        %635 = vmatpush1.msra.mxu0 %v616
        %636 = vmatprep.subr.mxu0 0.0
        %637 = vmatpush1.msra.mxu0 %v617
        %638 = vmatprep.subr.mxu0 0.0
        %639 = vmatpush1.msra.mxu0 %v618
        %640 = vmatprep.subr.mxu0 0.0
        %641 = vmatpush1.msra.mxu0 %v619
        %642 = vmatprep.subr.mxu0 0.0
        %643 = vmatpush1.msra.mxu0 0.0
        %644 = vmatprep.subr.mxu0 0.0
        %645 = vmatpush1.msra.mxu0 0.0
        %646 = vmatprep.subr.mxu0 0.0
        %647 = vmatpush1.msra.mxu0 0.0
        %648 = vmatprep.subr.mxu0 0.0
        %649 = vmatpush1.msra.mxu0 0.0
        %650 = vmatprep.subr.mxu0 0.0
        %651 = vmatpush1.msra.mxu0 0.0
        %652 = vmatprep.subr.mxu0 0.0
        %653 = vmatpush1.msra.mxu0 0.0
        %654 = vmatprep.subr.mxu0 0.0
        %655 = vmatpush1.msra.mxu0 0.0
        %656 = vmatprep.subr.mxu0 0.0
        %657 = vmatpush1.msra.mxu0 0.0
        %658 = vmatprep.subr.mxu0 0.0
        %659 = vmatpush1.msra.mxu0 0.0
        %660 = vmatprep.subr.mxu0 0.0
        %661 = vmatpush1.msra.mxu0 0.0
        %662 = vmatprep.subr.mxu0 0.0
        %663 = vmatpush1.msra.mxu0 0.0
        %664 = vmatprep.subr.mxu0 0.0
        %665 = vmatpush1.msra.mxu0 0.0
        %666 = vmatprep.subr.mxu0 0.0
        %667 = vmatpush1.msra.mxu0 0.0
        %668 = vmatprep.subr.mxu0 0.0
        %669 = vmatpush1.msra.mxu0 0.0
        %670 = vmatprep.subr.mxu0 0.0
        %671 = vmatpush1.msra.mxu0 0.0
        %672 = vmatprep.subr.mxu0 0.0
        %673 = vmatpush1.msra.mxu0 0.0
        %674 = vmatprep.subr.mxu0 0.0
        %675 = vmatpush1.msra.mxu0 0.0
        %676 = vmatprep.subr.mxu0 0.0
        %677 = vmatpush1.msra.mxu0 0.0
        %678 = vmatprep.subr.mxu0 0.0
        %679 = vmatpush1.msra.mxu0 0.0
        %680 = vmatprep.subr.mxu0 0.0
        %681 = vmatpush1.msra.mxu0 0.0
        %682 = vmatprep.subr.mxu0 0.0
        %683 = vmatpush1.msra.mxu0 0.0
        %684 = vmatprep.subr.mxu0 0.0
        %685 = vmatpush1.msra.mxu0 0.0
        %686 = vmatprep.subr.mxu0 0.0
        %687 = vmatpush1.msra.mxu0 0.0
        %688 = vmatprep.subr.mxu0 0.0
        %689 = vmatpush1.msra.mxu0 0.0
        %690 = vmatprep.subr.mxu0 0.0
        %691 = vmatpush1.msra.mxu0 0.0
        %692 = vmatprep.subr.mxu0 0.0
        %693 = vmatpush1.msra.mxu0 0.0
        %694 = vmatprep.subr.mxu0 0.0
        %695 = vmatpush1.msra.mxu0 0.0
        %696 = vmatprep.subr.mxu0 0.0
        %697 = vmatpush1.msra.mxu0 0.0
        %698 = vmatprep.mubr.f32.mxu0 0.0
        %699 = vmatmul.mubr.f32.gmra.mrb[0].mxu0 %v632
        %v700 = vpop.f32.mrb[0].mxu0
        %v701 = vadd.f32 0.0, %v700
        %v702 = vpop.f32.mrb[0].mxu0
        %703 = vdwg.mxu0
        %vm704 = vcmask 48128
        %v706 = vsel %vm704, %v629, 0
        %vm708 = vcmask 1045504
        %v710 = vsel %vm708, %v615, 0
        %712 = vmatprep.subr.mxu0 0.0
        %713 = vmatpush1.msra.mxu0 %v710
        %714 = vmatprep.subr.mxu0 0.0
        %715 = vmatpush1.msra.mxu0 0.0
        %716 = vmatprep.subr.mxu0 0.0
        %717 = vmatpush1.msra.mxu0 0.0
        %718 = vmatprep.subr.mxu0 0.0
        %719 = vmatpush1.msra.mxu0 0.0
        %720 = vmatprep.subr.mxu0 0.0
        %721 = vmatpush1.msra.mxu0 0.0
        %722 = vmatprep.subr.mxu0 0.0
        %723 = vmatpush1.msra.mxu0 0.0
        %724 = vmatprep.subr.mxu0 0.0
        %725 = vmatpush1.msra.mxu0 0.0
        %726 = vmatprep.subr.mxu0 0.0
        %727 = vmatpush1.msra.mxu0 0.0
        %728 = vmatprep.subr.mxu0 0.0
        %729 = vmatpush1.msra.mxu0 0.0
        %730 = vmatprep.subr.mxu0 0.0
        %731 = vmatpush1.msra.mxu0 0.0
        %732 = vmatprep.subr.mxu0 0.0
        %733 = vmatpush1.msra.mxu0 0.0
        %734 = vmatprep.subr.mxu0 0.0
        %735 = vmatpush1.msra.mxu0 0.0
        %736 = vmatprep.subr.mxu0 0.0
        %737 = vmatpush1.msra.mxu0 0.0
        %738 = vmatprep.subr.mxu0 0.0
        %739 = vmatpush1.msra.mxu0 0.0
        %740 = vmatprep.subr.mxu0 0.0
        %741 = vmatpush1.msra.mxu0 0.0
        %742 = vmatprep.subr.mxu0 0.0
        %743 = vmatpush1.msra.mxu0 0.0
        %744 = vmatprep.subr.mxu0 0.0
        %745 = vmatpush1.msra.mxu0 0.0
        %746 = vmatprep.subr.mxu0 0.0
        %747 = vmatpush1.msra.mxu0 0.0
        %748 = vmatprep.subr.mxu0 0.0
        %749 = vmatpush1.msra.mxu0 0.0
        %750 = vmatprep.subr.mxu0 0.0
        %751 = vmatpush1.msra.mxu0 0.0
        %752 = vmatprep.subr.mxu0 0.0
        %753 = vmatpush1.msra.mxu0 0.0
        %754 = vmatprep.subr.mxu0 0.0
        %755 = vmatpush1.msra.mxu0 0.0
        %756 = vmatprep.subr.mxu0 0.0
        %757 = vmatpush1.msra.mxu0 0.0
        %758 = vmatprep.subr.mxu0 0.0
        %759 = vmatpush1.msra.mxu0 0.0
        %760 = vmatprep.subr.mxu0 0.0
        %761 = vmatpush1.msra.mxu0 0.0
        %762 = vmatprep.subr.mxu0 0.0
        %763 = vmatpush1.msra.mxu0 0.0
        %764 = vmatprep.subr.mxu0 0.0
        %765 = vmatpush1.msra.mxu0 0.0
        %766 = vmatprep.subr.mxu0 0.0
        %767 = vmatpush1.msra.mxu0 0.0
        %768 = vmatprep.subr.mxu0 0.0
        %769 = vmatpush1.msra.mxu0 0.0
        %770 = vmatprep.subr.mxu0 0.0
        %771 = vmatpush1.msra.mxu0 0.0
        %772 = vmatprep.subr.mxu0 0.0
        %773 = vmatpush1.msra.mxu0 0.0
        %774 = vmatprep.subr.mxu0 0.0
        %775 = vmatpush1.msra.mxu0 0.0
        %776 = vmatprep.mubr.f32.mxu0 0.0
        %777 = vmatmul.mubr.f32.gmra.mrb[0].mxu0 %v706
        %v778 = vpop.f32.mrb[0].mxu0
        %v779 = vadd.f32 %v701, %v778
        %v780 = vpop.f32.mrb[0].mxu0
        %781 = vdwg.mxu0
        %v783 = vlaneseq
        %v784 = vshrl.u32 %v783, 7
        %v785 = vsub.s32 0, %v784
        %v786 = vrot.slane %v620, %v785
        %v788 = vadd.f32 %v779, %v786
        %v789 = vxor.u32 %v788, 2147483648
        %v790 = vmul.f32 %v789, 1.442695
        %v791 = vpow.pop %v790
        %v792 = vadd.f32 %v791, 1.0
        %v793 = vrcp.pop %v792
        %v794 = vmul.f32 1.0, %v793
        %v795 = vtanh.pop %v788
        %v796 = vmul.f32 %v794, 0.0
        %798 = vrot.lane.b32.xlu0 %v795, 64
        %v799 = vpop.permute.xlu0 %798
        %v801 = vmul.f32 %v794, %v799
        %803 = vrot.lane.b32.xlu0 %v801, 32
        %v804 = vpop.permute.xlu0 %803
        %v806 = vadd.f32 %v796, %v804
        %v807 = vtanh.pop %v806
        %809 = vrot.lane.b32.xlu0 %v807, 64
        %v810 = vpop.permute.xlu0 %809
        %v812 = vmul.f32 %v794, %v810
        %s813 = scalar_lea.vmem %s556, 8 [#allocation3]
        %v814 = vld [vmem:[%s813] sm:$0xff]
        %816 = vrot.lane.b32.xlu0 %v812, 32
        %v817 = vpop.permute.xlu0 %816
        %v818 = vsel %vm630, %v817, 0
        %820 = vmatprep.subr.mxu0 0.0
        %821 = vmatpush1.msra.mxu0 %v616
        %822 = vmatprep.subr.mxu0 0.0
        %823 = vmatpush1.msra.mxu0 %v617
        %824 = vmatprep.subr.mxu0 0.0
        %825 = vmatpush1.msra.mxu0 %v618
        %826 = vmatprep.subr.mxu0 0.0
        %827 = vmatpush1.msra.mxu0 %v619
        %828 = vmatprep.subr.mxu0 0.0
        %829 = vmatpush1.msra.mxu0 0.0
        %830 = vmatprep.subr.mxu0 0.0
        %831 = vmatpush1.msra.mxu0 0.0
        %832 = vmatprep.subr.mxu0 0.0
        %833 = vmatpush1.msra.mxu0 0.0
        %834 = vmatprep.subr.mxu0 0.0
        %835 = vmatpush1.msra.mxu0 0.0
        %836 = vmatprep.subr.mxu0 0.0
        %837 = vmatpush1.msra.mxu0 0.0
        %838 = vmatprep.subr.mxu0 0.0
        %839 = vmatpush1.msra.mxu0 0.0
        %840 = vmatprep.subr.mxu0 0.0
        %841 = vmatpush1.msra.mxu0 0.0
        %842 = vmatprep.subr.mxu0 0.0
        %843 = vmatpush1.msra.mxu0 0.0
        %844 = vmatprep.subr.mxu0 0.0
        %845 = vmatpush1.msra.mxu0 0.0
        %846 = vmatprep.subr.mxu0 0.0
        %847 = vmatpush1.msra.mxu0 0.0
        %848 = vmatprep.subr.mxu0 0.0
        %849 = vmatpush1.msra.mxu0 0.0
        %850 = vmatprep.subr.mxu0 0.0
        %851 = vmatpush1.msra.mxu0 0.0
        %852 = vmatprep.subr.mxu0 0.0
        %853 = vmatpush1.msra.mxu0 0.0
        %854 = vmatprep.subr.mxu0 0.0
        %855 = vmatpush1.msra.mxu0 0.0
        %856 = vmatprep.subr.mxu0 0.0
        %857 = vmatpush1.msra.mxu0 0.0
        %858 = vmatprep.subr.mxu0 0.0
        %859 = vmatpush1.msra.mxu0 0.0
        %860 = vmatprep.subr.mxu0 0.0
        %861 = vmatpush1.msra.mxu0 0.0
        %862 = vmatprep.subr.mxu0 0.0
        %863 = vmatpush1.msra.mxu0 0.0
        %864 = vmatprep.subr.mxu0 0.0
        %865 = vmatpush1.msra.mxu0 0.0
        %866 = vmatprep.subr.mxu0 0.0
        %867 = vmatpush1.msra.mxu0 0.0
        %868 = vmatprep.subr.mxu0 0.0
        %869 = vmatpush1.msra.mxu0 0.0
        %870 = vmatprep.subr.mxu0 0.0
        %871 = vmatpush1.msra.mxu0 0.0
        %872 = vmatprep.subr.mxu0 0.0
        %873 = vmatpush1.msra.mxu0 0.0
        %874 = vmatprep.subr.mxu0 0.0
        %875 = vmatpush1.msra.mxu0 0.0
        %876 = vmatprep.subr.mxu0 0.0
        %877 = vmatpush1.msra.mxu0 0.0
        %878 = vmatprep.subr.mxu0 0.0
        %879 = vmatpush1.msra.mxu0 0.0
        %880 = vmatprep.subr.mxu0 0.0
        %881 = vmatpush1.msra.mxu0 0.0
        %882 = vmatprep.subr.mxu0 0.0
        %883 = vmatpush1.msra.mxu0 0.0
        %884 = vmatprep.mubr.f32.mxu0 0.0
        %885 = vmatmul.mubr.f32.gmra.mrb[0].mxu0 %v818
        %v886 = vpop.f32.mrb[0].mxu0
        %v887 = vadd.f32 0.0, %v886
        %v888 = vpop.f32.mrb[0].mxu0
        %889 = vdwg.mxu0
        %v891 = vsel %vm704, %v814, 0
        %893 = vmatprep.subr.mxu0 0.0
        %894 = vmatpush1.msra.mxu0 %v710
        %895 = vmatprep.subr.mxu0 0.0
        %896 = vmatpush1.msra.mxu0 0.0
        %897 = vmatprep.subr.mxu0 0.0
        %898 = vmatpush1.msra.mxu0 0.0
        %899 = vmatprep.subr.mxu0 0.0
        %900 = vmatpush1.msra.mxu0 0.0
        %901 = vmatprep.subr.mxu0 0.0
        %902 = vmatpush1.msra.mxu0 0.0
        %903 = vmatprep.subr.mxu0 0.0
        %904 = vmatpush1.msra.mxu0 0.0
        %905 = vmatprep.subr.mxu0 0.0
        %906 = vmatpush1.msra.mxu0 0.0
        %907 = vmatprep.subr.mxu0 0.0
        %908 = vmatpush1.msra.mxu0 0.0
        %909 = vmatprep.subr.mxu0 0.0
        %910 = vmatpush1.msra.mxu0 0.0
        %911 = vmatprep.subr.mxu0 0.0
        %912 = vmatpush1.msra.mxu0 0.0
        %913 = vmatprep.subr.mxu0 0.0
        %914 = vmatpush1.msra.mxu0 0.0
        %915 = vmatprep.subr.mxu0 0.0
        %916 = vmatpush1.msra.mxu0 0.0
        %917 = vmatprep.subr.mxu0 0.0
        %918 = vmatpush1.msra.mxu0 0.0
        %919 = vmatprep.subr.mxu0 0.0
        %920 = vmatpush1.msra.mxu0 0.0
        %921 = vmatprep.subr.mxu0 0.0
        %922 = vmatpush1.msra.mxu0 0.0
        %923 = vmatprep.subr.mxu0 0.0
        %924 = vmatpush1.msra.mxu0 0.0
        %925 = vmatprep.subr.mxu0 0.0
        %926 = vmatpush1.msra.mxu0 0.0
        %927 = vmatprep.subr.mxu0 0.0
        %928 = vmatpush1.msra.mxu0 0.0
        %929 = vmatprep.subr.mxu0 0.0
        %930 = vmatpush1.msra.mxu0 0.0
        %931 = vmatprep.subr.mxu0 0.0
        %932 = vmatpush1.msra.mxu0 0.0
        %933 = vmatprep.subr.mxu0 0.0
        %934 = vmatpush1.msra.mxu0 0.0
        %935 = vmatprep.subr.mxu0 0.0
        %936 = vmatpush1.msra.mxu0 0.0
        %937 = vmatprep.subr.mxu0 0.0
        %938 = vmatpush1.msra.mxu0 0.0
        %939 = vmatprep.subr.mxu0 0.0
        %940 = vmatpush1.msra.mxu0 0.0
        %941 = vmatprep.subr.mxu0 0.0
        %942 = vmatpush1.msra.mxu0 0.0
        %943 = vmatprep.subr.mxu0 0.0
        %944 = vmatpush1.msra.mxu0 0.0
        %945 = vmatprep.subr.mxu0 0.0
        %946 = vmatpush1.msra.mxu0 0.0
        %947 = vmatprep.subr.mxu0 0.0
        %948 = vmatpush1.msra.mxu0 0.0
        %949 = vmatprep.subr.mxu0 0.0
        %950 = vmatpush1.msra.mxu0 0.0
        %951 = vmatprep.subr.mxu0 0.0
        %952 = vmatpush1.msra.mxu0 0.0
        %953 = vmatprep.subr.mxu0 0.0
        %954 = vmatpush1.msra.mxu0 0.0
        %955 = vmatprep.subr.mxu0 0.0
        %956 = vmatpush1.msra.mxu0 0.0
        %957 = vmatprep.mubr.f32.mxu0 0.0
        %958 = vmatmul.mubr.f32.gmra.mrb[0].mxu0 %v891
        %v959 = vpop.f32.mrb[0].mxu0
        %v960 = vadd.f32 %v887, %v959
        %v961 = vpop.f32.mrb[0].mxu0
        %962 = vdwg.mxu0
        %v963 = vadd.f32 %v960, %v786
        %v964 = vxor.u32 %v963, 2147483648
        %v965 = vmul.f32 %v964, 1.442695
        %v966 = vpow.pop %v965
        %v967 = vadd.f32 %v966, 1.0
        %v968 = vrcp.pop %v967
        %v969 = vmul.f32 1.0, %v968
        %v970 = vtanh.pop %v963
        %v971 = vmul.f32 %v969, %v806
        %973 = vrot.lane.b32.xlu0 %v970, 64
        %v974 = vpop.permute.xlu0 %973
        %v976 = vmul.f32 %v969, %v974
        %978 = vrot.lane.b32.xlu0 %v976, 32
        %v979 = vpop.permute.xlu0 %978
        %v981 = vadd.f32 %v971, %v979
        %v982 = vtanh.pop %v981
        %984 = vrot.lane.b32.xlu0 %v982, 64
        %v985 = vpop.permute.xlu0 %984
        %v987 = vmul.f32 %v969, %v985
        %s988 = scalar_lea.vmem %s556, 16 [#allocation3]
        %v989 = vld [vmem:[%s988] sm:$0xff]
        %991 = vrot.lane.b32.xlu0 %v987, 32
        %v992 = vpop.permute.xlu0 %991
        %v993 = vsel %vm630, %v992, 0
        %995 = vmatprep.subr.mxu0 0.0
        %996 = vmatpush1.msra.mxu0 %v616
        %997 = vmatprep.subr.mxu0 0.0
        %998 = vmatpush1.msra.mxu0 %v617
        %999 = vmatprep.subr.mxu0 0.0
        %1000 = vmatpush1.msra.mxu0 %v618
        %1001 = vmatprep.subr.mxu0 0.0
        %1002 = vmatpush1.msra.mxu0 %v619
        %1003 = vmatprep.subr.mxu0 0.0
        %1004 = vmatpush1.msra.mxu0 0.0
        %1005 = vmatprep.subr.mxu0 0.0
        %1006 = vmatpush1.msra.mxu0 0.0
        %1007 = vmatprep.subr.mxu0 0.0
        %1008 = vmatpush1.msra.mxu0 0.0
        %1009 = vmatprep.subr.mxu0 0.0
        %1010 = vmatpush1.msra.mxu0 0.0
        %1011 = vmatprep.subr.mxu0 0.0
        %1012 = vmatpush1.msra.mxu0 0.0
        %1013 = vmatprep.subr.mxu0 0.0
        %1014 = vmatpush1.msra.mxu0 0.0
        %1015 = vmatprep.subr.mxu0 0.0
        %1016 = vmatpush1.msra.mxu0 0.0
        %1017 = vmatprep.subr.mxu0 0.0
        %1018 = vmatpush1.msra.mxu0 0.0
        %1019 = vmatprep.subr.mxu0 0.0
        %1020 = vmatpush1.msra.mxu0 0.0
        %1021 = vmatprep.subr.mxu0 0.0
        %1022 = vmatpush1.msra.mxu0 0.0
        %1023 = vmatprep.subr.mxu0 0.0
        %1024 = vmatpush1.msra.mxu0 0.0
        %1025 = vmatprep.subr.mxu0 0.0
        %1026 = vmatpush1.msra.mxu0 0.0
        %1027 = vmatprep.subr.mxu0 0.0
        %1028 = vmatpush1.msra.mxu0 0.0
        %1029 = vmatprep.subr.mxu0 0.0
        %1030 = vmatpush1.msra.mxu0 0.0
        %1031 = vmatprep.subr.mxu0 0.0
        %1032 = vmatpush1.msra.mxu0 0.0
        %1033 = vmatprep.subr.mxu0 0.0
        %1034 = vmatpush1.msra.mxu0 0.0
        %1035 = vmatprep.subr.mxu0 0.0
        %1036 = vmatpush1.msra.mxu0 0.0
        %1037 = vmatprep.subr.mxu0 0.0
        %1038 = vmatpush1.msra.mxu0 0.0
        %1039 = vmatprep.subr.mxu0 0.0
        %1040 = vmatpush1.msra.mxu0 0.0
        %1041 = vmatprep.subr.mxu0 0.0
        %1042 = vmatpush1.msra.mxu0 0.0
        %1043 = vmatprep.subr.mxu0 0.0
        %1044 = vmatpush1.msra.mxu0 0.0
        %1045 = vmatprep.subr.mxu0 0.0
        %1046 = vmatpush1.msra.mxu0 0.0
        %1047 = vmatprep.subr.mxu0 0.0
        %1048 = vmatpush1.msra.mxu0 0.0
        %1049 = vmatprep.subr.mxu0 0.0
        %1050 = vmatpush1.msra.mxu0 0.0
        %1051 = vmatprep.subr.mxu0 0.0
        %1052 = vmatpush1.msra.mxu0 0.0
        %1053 = vmatprep.subr.mxu0 0.0
        %1054 = vmatpush1.msra.mxu0 0.0
        %1055 = vmatprep.subr.mxu0 0.0
        %1056 = vmatpush1.msra.mxu0 0.0
        %1057 = vmatprep.subr.mxu0 0.0
        %1058 = vmatpush1.msra.mxu0 0.0
        %1059 = vmatprep.mubr.f32.mxu0 0.0
        %1060 = vmatmul.mubr.f32.gmra.mrb[0].mxu0 %v993
        %v1061 = vpop.f32.mrb[0].mxu0
        %v1062 = vadd.f32 0.0, %v1061
        %v1063 = vpop.f32.mrb[0].mxu0
        %1064 = vdwg.mxu0
        %v1066 = vsel %vm704, %v989, 0
        %1068 = vmatprep.subr.mxu0 0.0
        %1069 = vmatpush1.msra.mxu0 %v710
        %1070 = vmatprep.subr.mxu0 0.0
        %1071 = vmatpush1.msra.mxu0 0.0
        %1072 = vmatprep.subr.mxu0 0.0
        %1073 = vmatpush1.msra.mxu0 0.0
        %1074 = vmatprep.subr.mxu0 0.0
        %1075 = vmatpush1.msra.mxu0 0.0
        %1076 = vmatprep.subr.mxu0 0.0
        %1077 = vmatpush1.msra.mxu0 0.0
        %1078 = vmatprep.subr.mxu0 0.0
        %1079 = vmatpush1.msra.mxu0 0.0
        %1080 = vmatprep.subr.mxu0 0.0
        %1081 = vmatpush1.msra.mxu0 0.0
        %1082 = vmatprep.subr.mxu0 0.0
        %1083 = vmatpush1.msra.mxu0 0.0
        %1084 = vmatprep.subr.mxu0 0.0
        %1085 = vmatpush1.msra.mxu0 0.0
        %1086 = vmatprep.subr.mxu0 0.0
        %1087 = vmatpush1.msra.mxu0 0.0
        %1088 = vmatprep.subr.mxu0 0.0
        %1089 = vmatpush1.msra.mxu0 0.0
        %1090 = vmatprep.subr.mxu0 0.0
        %1091 = vmatpush1.msra.mxu0 0.0
        %1092 = vmatprep.subr.mxu0 0.0
        %1093 = vmatpush1.msra.mxu0 0.0
        %1094 = vmatprep.subr.mxu0 0.0
        %1095 = vmatpush1.msra.mxu0 0.0
        %1096 = vmatprep.subr.mxu0 0.0
        %1097 = vmatpush1.msra.mxu0 0.0
        %1098 = vmatprep.subr.mxu0 0.0
        %1099 = vmatpush1.msra.mxu0 0.0
        %1100 = vmatprep.subr.mxu0 0.0
        %1101 = vmatpush1.msra.mxu0 0.0
        %1102 = vmatprep.subr.mxu0 0.0
        %1103 = vmatpush1.msra.mxu0 0.0
        %1104 = vmatprep.subr.mxu0 0.0
        %1105 = vmatpush1.msra.mxu0 0.0
        %1106 = vmatprep.subr.mxu0 0.0
        %1107 = vmatpush1.msra.mxu0 0.0
        %1108 = vmatprep.subr.mxu0 0.0
        %1109 = vmatpush1.msra.mxu0 0.0
        %1110 = vmatprep.subr.mxu0 0.0
        %1111 = vmatpush1.msra.mxu0 0.0
        %1112 = vmatprep.subr.mxu0 0.0
        %1113 = vmatpush1.msra.mxu0 0.0
        %1114 = vmatprep.subr.mxu0 0.0
        %1115 = vmatpush1.msra.mxu0 0.0
        %1116 = vmatprep.subr.mxu0 0.0
        %1117 = vmatpush1.msra.mxu0 0.0
        %1118 = vmatprep.subr.mxu0 0.0
        %1119 = vmatpush1.msra.mxu0 0.0
        %1120 = vmatprep.subr.mxu0 0.0
        %1121 = vmatpush1.msra.mxu0 0.0
        %1122 = vmatprep.subr.mxu0 0.0
        %1123 = vmatpush1.msra.mxu0 0.0
        %1124 = vmatprep.subr.mxu0 0.0
        %1125 = vmatpush1.msra.mxu0 0.0
        %1126 = vmatprep.subr.mxu0 0.0
        %1127 = vmatpush1.msra.mxu0 0.0
        %1128 = vmatprep.subr.mxu0 0.0
        %1129 = vmatpush1.msra.mxu0 0.0
        %1130 = vmatprep.subr.mxu0 0.0
        %1131 = vmatpush1.msra.mxu0 0.0
        %1132 = vmatprep.mubr.f32.mxu0 0.0
        %1133 = vmatmul.mubr.f32.gmra.mrb[0].mxu0 %v1066
        %v1134 = vpop.f32.mrb[0].mxu0
        %v1135 = vadd.f32 %v1062, %v1134
        %v1136 = vpop.f32.mrb[0].mxu0
        %1137 = vdwg.mxu0
        %v1138 = vadd.f32 %v1135, %v786
        %v1139 = vxor.u32 %v1138, 2147483648
        %v1140 = vmul.f32 %v1139, 1.442695
        %v1141 = vpow.pop %v1140
        %v1142 = vadd.f32 %v1141, 1.0
        %v1143 = vrcp.pop %v1142
        %v1144 = vmul.f32 1.0, %v1143
        %v1145 = vtanh.pop %v1138
        %v1146 = vmul.f32 %v1144, %v981
        %1148 = vrot.lane.b32.xlu0 %v1145, 64
        %v1149 = vpop.permute.xlu0 %1148
        %v1151 = vmul.f32 %v1144, %v1149
        %1153 = vrot.lane.b32.xlu0 %v1151, 32
        %v1154 = vpop.permute.xlu0 %1153
        %v1156 = vadd.f32 %v1146, %v1154
        %v1157 = vtanh.pop %v1156
        %1159 = vrot.lane.b32.xlu0 %v1157, 64
        %v1160 = vpop.permute.xlu0 %1159
        %v1162 = vmul.f32 %v1144, %v1160
        %s1163 = scalar_lea.vmem %s556, 24 [#allocation3]
        %v1164 = vld [vmem:[%s1163] sm:$0xff]
        %1166 = vrot.lane.b32.xlu0 %v1162, 32
        %v1167 = vpop.permute.xlu0 %1166
        %v1168 = vsel %vm630, %v1167, 0
        %1170 = vmatprep.subr.mxu0 0.0
        %1171 = vmatpush1.msra.mxu0 %v616
        %1172 = vmatprep.subr.mxu0 0.0
        %1173 = vmatpush1.msra.mxu0 %v617
        %1174 = vmatprep.subr.mxu0 0.0
        %1175 = vmatpush1.msra.mxu0 %v618
        %1176 = vmatprep.subr.mxu0 0.0
        %1177 = vmatpush1.msra.mxu0 %v619
        %1178 = vmatprep.subr.mxu0 0.0
        %1179 = vmatpush1.msra.mxu0 0.0
        %1180 = vmatprep.subr.mxu0 0.0
        %1181 = vmatpush1.msra.mxu0 0.0
        %1182 = vmatprep.subr.mxu0 0.0
        %1183 = vmatpush1.msra.mxu0 0.0
        %1184 = vmatprep.subr.mxu0 0.0
        %1185 = vmatpush1.msra.mxu0 0.0
        %1186 = vmatprep.subr.mxu0 0.0
        %1187 = vmatpush1.msra.mxu0 0.0
        %1188 = vmatprep.subr.mxu0 0.0
        %1189 = vmatpush1.msra.mxu0 0.0
        %1190 = vmatprep.subr.mxu0 0.0
        %1191 = vmatpush1.msra.mxu0 0.0
        %1192 = vmatprep.subr.mxu0 0.0
        %1193 = vmatpush1.msra.mxu0 0.0
        %1194 = vmatprep.subr.mxu0 0.0
        %1195 = vmatpush1.msra.mxu0 0.0
        %1196 = vmatprep.subr.mxu0 0.0
        %1197 = vmatpush1.msra.mxu0 0.0
        %1198 = vmatprep.subr.mxu0 0.0
        %1199 = vmatpush1.msra.mxu0 0.0
        %1200 = vmatprep.subr.mxu0 0.0
        %1201 = vmatpush1.msra.mxu0 0.0
        %1202 = vmatprep.subr.mxu0 0.0
        %1203 = vmatpush1.msra.mxu0 0.0
        %1204 = vmatprep.subr.mxu0 0.0
        %1205 = vmatpush1.msra.mxu0 0.0
        %1206 = vmatprep.subr.mxu0 0.0
        %1207 = vmatpush1.msra.mxu0 0.0
        %1208 = vmatprep.subr.mxu0 0.0
        %1209 = vmatpush1.msra.mxu0 0.0
        %1210 = vmatprep.subr.mxu0 0.0
        %1211 = vmatpush1.msra.mxu0 0.0
        %1212 = vmatprep.subr.mxu0 0.0
        %1213 = vmatpush1.msra.mxu0 0.0
        %1214 = vmatprep.subr.mxu0 0.0
        %1215 = vmatpush1.msra.mxu0 0.0
        %1216 = vmatprep.subr.mxu0 0.0
        %1217 = vmatpush1.msra.mxu0 0.0
        %1218 = vmatprep.subr.mxu0 0.0
        %1219 = vmatpush1.msra.mxu0 0.0
        %1220 = vmatprep.subr.mxu0 0.0
        %1221 = vmatpush1.msra.mxu0 0.0
        %1222 = vmatprep.subr.mxu0 0.0
        %1223 = vmatpush1.msra.mxu0 0.0
        %1224 = vmatprep.subr.mxu0 0.0
        %1225 = vmatpush1.msra.mxu0 0.0
        %1226 = vmatprep.subr.mxu0 0.0
        %1227 = vmatpush1.msra.mxu0 0.0
        %1228 = vmatprep.subr.mxu0 0.0
        %1229 = vmatpush1.msra.mxu0 0.0
        %1230 = vmatprep.subr.mxu0 0.0
        %1231 = vmatpush1.msra.mxu0 0.0
        %1232 = vmatprep.subr.mxu0 0.0
        %1233 = vmatpush1.msra.mxu0 0.0
        %1234 = vmatprep.mubr.f32.mxu0 0.0
        %1235 = vmatmul.mubr.f32.gmra.mrb[0].mxu0 %v1168
        %v1236 = vpop.f32.mrb[0].mxu0
        %v1237 = vadd.f32 0.0, %v1236
        %v1238 = vpop.f32.mrb[0].mxu0
        %1239 = vdwg.mxu0
        %v1241 = vsel %vm704, %v1164, 0
        %1243 = vmatprep.subr.mxu0 0.0
        %1244 = vmatpush1.msra.mxu0 %v710
        %1245 = vmatprep.subr.mxu0 0.0
        %1246 = vmatpush1.msra.mxu0 0.0
        %1247 = vmatprep.subr.mxu0 0.0
        %1248 = vmatpush1.msra.mxu0 0.0
        %1249 = vmatprep.subr.mxu0 0.0
        %1250 = vmatpush1.msra.mxu0 0.0
        %1251 = vmatprep.subr.mxu0 0.0
        %1252 = vmatpush1.msra.mxu0 0.0
        %1253 = vmatprep.subr.mxu0 0.0
        %1254 = vmatpush1.msra.mxu0 0.0
        %1255 = vmatprep.subr.mxu0 0.0
        %1256 = vmatpush1.msra.mxu0 0.0
        %1257 = vmatprep.subr.mxu0 0.0
        %1258 = vmatpush1.msra.mxu0 0.0
        %1259 = vmatprep.subr.mxu0 0.0
        %1260 = vmatpush1.msra.mxu0 0.0
        %1261 = vmatprep.subr.mxu0 0.0
        %1262 = vmatpush1.msra.mxu0 0.0
        %1263 = vmatprep.subr.mxu0 0.0
        %1264 = vmatpush1.msra.mxu0 0.0
        %1265 = vmatprep.subr.mxu0 0.0
        %1266 = vmatpush1.msra.mxu0 0.0
        %1267 = vmatprep.subr.mxu0 0.0
        %1268 = vmatpush1.msra.mxu0 0.0
        %1269 = vmatprep.subr.mxu0 0.0
        %1270 = vmatpush1.msra.mxu0 0.0
        %1271 = vmatprep.subr.mxu0 0.0
        %1272 = vmatpush1.msra.mxu0 0.0
        %1273 = vmatprep.subr.mxu0 0.0
        %1274 = vmatpush1.msra.mxu0 0.0
        %1275 = vmatprep.subr.mxu0 0.0
        %1276 = vmatpush1.msra.mxu0 0.0
        %1277 = vmatprep.subr.mxu0 0.0
        %1278 = vmatpush1.msra.mxu0 0.0
        %1279 = vmatprep.subr.mxu0 0.0
        %1280 = vmatpush1.msra.mxu0 0.0
        %1281 = vmatprep.subr.mxu0 0.0
        %1282 = vmatpush1.msra.mxu0 0.0
        %1283 = vmatprep.subr.mxu0 0.0
        %1284 = vmatpush1.msra.mxu0 0.0
        %1285 = vmatprep.subr.mxu0 0.0
        %1286 = vmatpush1.msra.mxu0 0.0
        %1287 = vmatprep.subr.mxu0 0.0
        %1288 = vmatpush1.msra.mxu0 0.0
        %1289 = vmatprep.subr.mxu0 0.0
        %1290 = vmatpush1.msra.mxu0 0.0
        %1291 = vmatprep.subr.mxu0 0.0
        %1292 = vmatpush1.msra.mxu0 0.0
        %1293 = vmatprep.subr.mxu0 0.0
        %1294 = vmatpush1.msra.mxu0 0.0
        %1295 = vmatprep.subr.mxu0 0.0
        %1296 = vmatpush1.msra.mxu0 0.0
        %1297 = vmatprep.subr.mxu0 0.0
        %1298 = vmatpush1.msra.mxu0 0.0
        %1299 = vmatprep.subr.mxu0 0.0
        %1300 = vmatpush1.msra.mxu0 0.0
        %1301 = vmatprep.subr.mxu0 0.0
        %1302 = vmatpush1.msra.mxu0 0.0
        %1303 = vmatprep.subr.mxu0 0.0
        %1304 = vmatpush1.msra.mxu0 0.0
        %1305 = vmatprep.subr.mxu0 0.0
        %1306 = vmatpush1.msra.mxu0 0.0
        %1307 = vmatprep.mubr.f32.mxu0 0.0
        %1308 = vmatmul.mubr.f32.gmra.mrb[0].mxu0 %v1241
        %v1309 = vpop.f32.mrb[0].mxu0
        %v1310 = vadd.f32 %v1237, %v1309
        %v1311 = vpop.f32.mrb[0].mxu0
        %1312 = vdwg.mxu0
        %v1313 = vadd.f32 %v1310, %v786
        %v1314 = vxor.u32 %v1313, 2147483648
        %v1315 = vmul.f32 %v1314, 1.442695
        %v1316 = vpow.pop %v1315
        %v1317 = vadd.f32 %v1316, 1.0
        %v1318 = vrcp.pop %v1317
        %v1319 = vmul.f32 1.0, %v1318
        %v1320 = vtanh.pop %v1313
        %v1321 = vmul.f32 %v1319, %v1156
        %1323 = vrot.lane.b32.xlu0 %v1320, 64
        %v1324 = vpop.permute.xlu0 %1323
        %v1326 = vmul.f32 %v1319, %v1324
        %1328 = vrot.lane.b32.xlu0 %v1326, 32
        %v1329 = vpop.permute.xlu0 %1328
        %v1331 = vadd.f32 %v1321, %v1329
        %v1332 = vtanh.pop %v1331
        %1334 = vrot.lane.b32.xlu0 %v1332, 64
        %v1335 = vpop.permute.xlu0 %1334
        %v1337 = vmul.f32 %v1319, %v1335
        %s1338 = scalar_lea.vmem %s556, 32 [#allocation3]
        %v1339 = vld [vmem:[%s1338] sm:$0xff]
        %1341 = vrot.lane.b32.xlu0 %v1337, 32
        %v1342 = vpop.permute.xlu0 %1341
        %v1343 = vsel %vm630, %v1342, 0
        %1345 = vmatprep.subr.mxu0 0.0
        %1346 = vmatpush1.msra.mxu0 %v616
        %1347 = vmatprep.subr.mxu0 0.0
        %1348 = vmatpush1.msra.mxu0 %v617
        %1349 = vmatprep.subr.mxu0 0.0
        %1350 = vmatpush1.msra.mxu0 %v618
        %1351 = vmatprep.subr.mxu0 0.0
        %1352 = vmatpush1.msra.mxu0 %v619
        %1353 = vmatprep.subr.mxu0 0.0
        %1354 = vmatpush1.msra.mxu0 0.0
        %1355 = vmatprep.subr.mxu0 0.0
        %1356 = vmatpush1.msra.mxu0 0.0
        %1357 = vmatprep.subr.mxu0 0.0
        %1358 = vmatpush1.msra.mxu0 0.0
        %1359 = vmatprep.subr.mxu0 0.0
        %1360 = vmatpush1.msra.mxu0 0.0
        %1361 = vmatprep.subr.mxu0 0.0
        %1362 = vmatpush1.msra.mxu0 0.0
        %1363 = vmatprep.subr.mxu0 0.0
        %1364 = vmatpush1.msra.mxu0 0.0
        %1365 = vmatprep.subr.mxu0 0.0
        %1366 = vmatpush1.msra.mxu0 0.0
        %1367 = vmatprep.subr.mxu0 0.0
        %1368 = vmatpush1.msra.mxu0 0.0
        %1369 = vmatprep.subr.mxu0 0.0
        %1370 = vmatpush1.msra.mxu0 0.0
        %1371 = vmatprep.subr.mxu0 0.0
        %1372 = vmatpush1.msra.mxu0 0.0
        %1373 = vmatprep.subr.mxu0 0.0
        %1374 = vmatpush1.msra.mxu0 0.0
        %1375 = vmatprep.subr.mxu0 0.0
        %1376 = vmatpush1.msra.mxu0 0.0
        %1377 = vmatprep.subr.mxu0 0.0
        %1378 = vmatpush1.msra.mxu0 0.0
        %1379 = vmatprep.subr.mxu0 0.0
        %1380 = vmatpush1.msra.mxu0 0.0
        %1381 = vmatprep.subr.mxu0 0.0
        %1382 = vmatpush1.msra.mxu0 0.0
        %1383 = vmatprep.subr.mxu0 0.0
        %1384 = vmatpush1.msra.mxu0 0.0
        %1385 = vmatprep.subr.mxu0 0.0
        %1386 = vmatpush1.msra.mxu0 0.0
        %1387 = vmatprep.subr.mxu0 0.0
        %1388 = vmatpush1.msra.mxu0 0.0
        %1389 = vmatprep.subr.mxu0 0.0
        %1390 = vmatpush1.msra.mxu0 0.0
        %1391 = vmatprep.subr.mxu0 0.0
        %1392 = vmatpush1.msra.mxu0 0.0
        %1393 = vmatprep.subr.mxu0 0.0
        %1394 = vmatpush1.msra.mxu0 0.0
        %1395 = vmatprep.subr.mxu0 0.0
        %1396 = vmatpush1.msra.mxu0 0.0
        %1397 = vmatprep.subr.mxu0 0.0
        %1398 = vmatpush1.msra.mxu0 0.0
        %1399 = vmatprep.subr.mxu0 0.0
        %1400 = vmatpush1.msra.mxu0 0.0
        %1401 = vmatprep.subr.mxu0 0.0
        %1402 = vmatpush1.msra.mxu0 0.0
        %1403 = vmatprep.subr.mxu0 0.0
        %1404 = vmatpush1.msra.mxu0 0.0
        %1405 = vmatprep.subr.mxu0 0.0
        %1406 = vmatpush1.msra.mxu0 0.0
        %1407 = vmatprep.subr.mxu0 0.0
        %1408 = vmatpush1.msra.mxu0 0.0
        %1409 = vmatprep.mubr.f32.mxu0 0.0
        %1410 = vmatmul.mubr.f32.gmra.mrb[0].mxu0 %v1343
        %v1411 = vpop.f32.mrb[0].mxu0
        %v1412 = vadd.f32 0.0, %v1411
        %v1413 = vpop.f32.mrb[0].mxu0
        %1414 = vdwg.mxu0
        %v1416 = vsel %vm704, %v1339, 0
        %1418 = vmatprep.subr.mxu0 0.0
        %1419 = vmatpush1.msra.mxu0 %v710
        %1420 = vmatprep.subr.mxu0 0.0
        %1421 = vmatpush1.msra.mxu0 0.0
        %1422 = vmatprep.subr.mxu0 0.0
        %1423 = vmatpush1.msra.mxu0 0.0
        %1424 = vmatprep.subr.mxu0 0.0
        %1425 = vmatpush1.msra.mxu0 0.0
        %1426 = vmatprep.subr.mxu0 0.0
        %1427 = vmatpush1.msra.mxu0 0.0
        %1428 = vmatprep.subr.mxu0 0.0
        %1429 = vmatpush1.msra.mxu0 0.0
        %1430 = vmatprep.subr.mxu0 0.0
        %1431 = vmatpush1.msra.mxu0 0.0
        %1432 = vmatprep.subr.mxu0 0.0
        %1433 = vmatpush1.msra.mxu0 0.0
        %1434 = vmatprep.subr.mxu0 0.0
        %1435 = vmatpush1.msra.mxu0 0.0
        %1436 = vmatprep.subr.mxu0 0.0
        %1437 = vmatpush1.msra.mxu0 0.0
        %1438 = vmatprep.subr.mxu0 0.0
        %1439 = vmatpush1.msra.mxu0 0.0
        %1440 = vmatprep.subr.mxu0 0.0
        %1441 = vmatpush1.msra.mxu0 0.0
        %1442 = vmatprep.subr.mxu0 0.0
        %1443 = vmatpush1.msra.mxu0 0.0
        %1444 = vmatprep.subr.mxu0 0.0
        %1445 = vmatpush1.msra.mxu0 0.0
        %1446 = vmatprep.subr.mxu0 0.0
        %1447 = vmatpush1.msra.mxu0 0.0
        %1448 = vmatprep.subr.mxu0 0.0
        %1449 = vmatpush1.msra.mxu0 0.0
        %1450 = vmatprep.subr.mxu0 0.0
        %1451 = vmatpush1.msra.mxu0 0.0
        %1452 = vmatprep.subr.mxu0 0.0
        %1453 = vmatpush1.msra.mxu0 0.0
        %1454 = vmatprep.subr.mxu0 0.0
        %1455 = vmatpush1.msra.mxu0 0.0
        %1456 = vmatprep.subr.mxu0 0.0
        %1457 = vmatpush1.msra.mxu0 0.0
        %1458 = vmatprep.subr.mxu0 0.0
        %1459 = vmatpush1.msra.mxu0 0.0
        %1460 = vmatprep.subr.mxu0 0.0
        %1461 = vmatpush1.msra.mxu0 0.0
        %1462 = vmatprep.subr.mxu0 0.0
        %1463 = vmatpush1.msra.mxu0 0.0
        %1464 = vmatprep.subr.mxu0 0.0
        %1465 = vmatpush1.msra.mxu0 0.0
        %1466 = vmatprep.subr.mxu0 0.0
        %1467 = vmatpush1.msra.mxu0 0.0
        %1468 = vmatprep.subr.mxu0 0.0
        %1469 = vmatpush1.msra.mxu0 0.0
        %1470 = vmatprep.subr.mxu0 0.0
        %1471 = vmatpush1.msra.mxu0 0.0
        %1472 = vmatprep.subr.mxu0 0.0
        %1473 = vmatpush1.msra.mxu0 0.0
        %1474 = vmatprep.subr.mxu0 0.0
        %1475 = vmatpush1.msra.mxu0 0.0
        %1476 = vmatprep.subr.mxu0 0.0
        %1477 = vmatpush1.msra.mxu0 0.0
        %1478 = vmatprep.subr.mxu0 0.0
        %1479 = vmatpush1.msra.mxu0 0.0
        %1480 = vmatprep.subr.mxu0 0.0
        %1481 = vmatpush1.msra.mxu0 0.0
        %1482 = vmatprep.mubr.f32.mxu0 0.0
        %1483 = vmatmul.mubr.f32.gmra.mrb[0].mxu0 %v1416
        %v1484 = vpop.f32.mrb[0].mxu0
        %v1485 = vadd.f32 %v1412, %v1484
        %v1486 = vpop.f32.mrb[0].mxu0
        %1487 = vdwg.mxu0
        %v1488 = vadd.f32 %v1485, %v786
        %v1489 = vxor.u32 %v1488, 2147483648
        %v1490 = vmul.f32 %v1489, 1.442695
        %v1491 = vpow.pop %v1490
        %v1492 = vadd.f32 %v1491, 1.0
        %v1493 = vrcp.pop %v1492
        %v1494 = vmul.f32 1.0, %v1493
        %v1495 = vtanh.pop %v1488
        %v1496 = vmul.f32 %v1494, %v1331
        %1498 = vrot.lane.b32.xlu0 %v1495, 64
        %v1499 = vpop.permute.xlu0 %1498
        %v1501 = vmul.f32 %v1494, %v1499
        %1503 = vrot.lane.b32.xlu0 %v1501, 32
        %v1504 = vpop.permute.xlu0 %1503
        %v1506 = vadd.f32 %v1496, %v1504
        %v1507 = vtanh.pop %v1506
        %1509 = vrot.lane.b32.xlu0 %v1507, 64
        %v1510 = vpop.permute.xlu0 %1509
        %v1512 = vmul.f32 %v1494, %v1510
        %s1513 = scalar_lea.vmem %s556, 40 [#allocation3]
        %v1514 = vld [vmem:[%s1513] sm:$0xff]
        %1516 = vrot.lane.b32.xlu0 %v1512, 32
        %v1517 = vpop.permute.xlu0 %1516
        %v1518 = vsel %vm630, %v1517, 0
        %1520 = vmatprep.subr.mxu0 0.0
        %1521 = vmatpush1.msra.mxu0 %v616
        %1522 = vmatprep.subr.mxu0 0.0
        %1523 = vmatpush1.msra.mxu0 %v617
        %1524 = vmatprep.subr.mxu0 0.0
        %1525 = vmatpush1.msra.mxu0 %v618
        %1526 = vmatprep.subr.mxu0 0.0
        %1527 = vmatpush1.msra.mxu0 %v619
        %1528 = vmatprep.subr.mxu0 0.0
        %1529 = vmatpush1.msra.mxu0 0.0
        %1530 = vmatprep.subr.mxu0 0.0
        %1531 = vmatpush1.msra.mxu0 0.0
        %1532 = vmatprep.subr.mxu0 0.0
        %1533 = vmatpush1.msra.mxu0 0.0
        %1534 = vmatprep.subr.mxu0 0.0
        %1535 = vmatpush1.msra.mxu0 0.0
        %1536 = vmatprep.subr.mxu0 0.0
        %1537 = vmatpush1.msra.mxu0 0.0
        %1538 = vmatprep.subr.mxu0 0.0
        %1539 = vmatpush1.msra.mxu0 0.0
        %1540 = vmatprep.subr.mxu0 0.0
        %1541 = vmatpush1.msra.mxu0 0.0
        %1542 = vmatprep.subr.mxu0 0.0
        %1543 = vmatpush1.msra.mxu0 0.0
        %1544 = vmatprep.subr.mxu0 0.0
        %1545 = vmatpush1.msra.mxu0 0.0
        %1546 = vmatprep.subr.mxu0 0.0
        %1547 = vmatpush1.msra.mxu0 0.0
        %1548 = vmatprep.subr.mxu0 0.0
        %1549 = vmatpush1.msra.mxu0 0.0
        %1550 = vmatprep.subr.mxu0 0.0
        %1551 = vmatpush1.msra.mxu0 0.0
        %1552 = vmatprep.subr.mxu0 0.0
        %1553 = vmatpush1.msra.mxu0 0.0
        %1554 = vmatprep.subr.mxu0 0.0
        %1555 = vmatpush1.msra.mxu0 0.0
        %1556 = vmatprep.subr.mxu0 0.0
        %1557 = vmatpush1.msra.mxu0 0.0
        %1558 = vmatprep.subr.mxu0 0.0
        %1559 = vmatpush1.msra.mxu0 0.0
        %1560 = vmatprep.subr.mxu0 0.0
        %1561 = vmatpush1.msra.mxu0 0.0
        %1562 = vmatprep.subr.mxu0 0.0
        %1563 = vmatpush1.msra.mxu0 0.0
        %1564 = vmatprep.subr.mxu0 0.0
        %1565 = vmatpush1.msra.mxu0 0.0
        %1566 = vmatprep.subr.mxu0 0.0
        %1567 = vmatpush1.msra.mxu0 0.0
        %1568 = vmatprep.subr.mxu0 0.0
        %1569 = vmatpush1.msra.mxu0 0.0
        %1570 = vmatprep.subr.mxu0 0.0
        %1571 = vmatpush1.msra.mxu0 0.0
        %1572 = vmatprep.subr.mxu0 0.0
        %1573 = vmatpush1.msra.mxu0 0.0
        %1574 = vmatprep.subr.mxu0 0.0
        %1575 = vmatpush1.msra.mxu0 0.0
        %1576 = vmatprep.subr.mxu0 0.0
        %1577 = vmatpush1.msra.mxu0 0.0
        %1578 = vmatprep.subr.mxu0 0.0
        %1579 = vmatpush1.msra.mxu0 0.0
        %1580 = vmatprep.subr.mxu0 0.0
        %1581 = vmatpush1.msra.mxu0 0.0
        %1582 = vmatprep.subr.mxu0 0.0
        %1583 = vmatpush1.msra.mxu0 0.0
        %1584 = vmatprep.mubr.f32.mxu0 0.0
        %1585 = vmatmul.mubr.f32.gmra.mrb[0].mxu0 %v1518
        %v1586 = vpop.f32.mrb[0].mxu0
        %v1587 = vadd.f32 0.0, %v1586
        %v1588 = vpop.f32.mrb[0].mxu0
        %1589 = vdwg.mxu0
        %v1591 = vsel %vm704, %v1514, 0
        %1593 = vmatprep.subr.mxu0 0.0
        %1594 = vmatpush1.msra.mxu0 %v710
        %1595 = vmatprep.subr.mxu0 0.0
        %1596 = vmatpush1.msra.mxu0 0.0
        %1597 = vmatprep.subr.mxu0 0.0
        %1598 = vmatpush1.msra.mxu0 0.0
        %1599 = vmatprep.subr.mxu0 0.0
        %1600 = vmatpush1.msra.mxu0 0.0
        %1601 = vmatprep.subr.mxu0 0.0
        %1602 = vmatpush1.msra.mxu0 0.0
        %1603 = vmatprep.subr.mxu0 0.0
        %1604 = vmatpush1.msra.mxu0 0.0
        %1605 = vmatprep.subr.mxu0 0.0
        %1606 = vmatpush1.msra.mxu0 0.0
        %1607 = vmatprep.subr.mxu0 0.0
        %1608 = vmatpush1.msra.mxu0 0.0
        %1609 = vmatprep.subr.mxu0 0.0
        %1610 = vmatpush1.msra.mxu0 0.0
        %1611 = vmatprep.subr.mxu0 0.0
        %1612 = vmatpush1.msra.mxu0 0.0
        %1613 = vmatprep.subr.mxu0 0.0
        %1614 = vmatpush1.msra.mxu0 0.0
        %1615 = vmatprep.subr.mxu0 0.0
        %1616 = vmatpush1.msra.mxu0 0.0
        %1617 = vmatprep.subr.mxu0 0.0
        %1618 = vmatpush1.msra.mxu0 0.0
        %1619 = vmatprep.subr.mxu0 0.0
        %1620 = vmatpush1.msra.mxu0 0.0
        %1621 = vmatprep.subr.mxu0 0.0
        %1622 = vmatpush1.msra.mxu0 0.0
        %1623 = vmatprep.subr.mxu0 0.0
        %1624 = vmatpush1.msra.mxu0 0.0
        %1625 = vmatprep.subr.mxu0 0.0
        %1626 = vmatpush1.msra.mxu0 0.0
        %1627 = vmatprep.subr.mxu0 0.0
        %1628 = vmatpush1.msra.mxu0 0.0
        %1629 = vmatprep.subr.mxu0 0.0
        %1630 = vmatpush1.msra.mxu0 0.0
        %1631 = vmatprep.subr.mxu0 0.0
        %1632 = vmatpush1.msra.mxu0 0.0
        %1633 = vmatprep.subr.mxu0 0.0
        %1634 = vmatpush1.msra.mxu0 0.0
        %1635 = vmatprep.subr.mxu0 0.0
        %1636 = vmatpush1.msra.mxu0 0.0
        %1637 = vmatprep.subr.mxu0 0.0
        %1638 = vmatpush1.msra.mxu0 0.0
        %1639 = vmatprep.subr.mxu0 0.0
        %1640 = vmatpush1.msra.mxu0 0.0
        %1641 = vmatprep.subr.mxu0 0.0
        %1642 = vmatpush1.msra.mxu0 0.0
        %1643 = vmatprep.subr.mxu0 0.0
        %1644 = vmatpush1.msra.mxu0 0.0
        %1645 = vmatprep.subr.mxu0 0.0
        %1646 = vmatpush1.msra.mxu0 0.0
        %1647 = vmatprep.subr.mxu0 0.0
        %1648 = vmatpush1.msra.mxu0 0.0
        %1649 = vmatprep.subr.mxu0 0.0
        %1650 = vmatpush1.msra.mxu0 0.0
        %1651 = vmatprep.subr.mxu0 0.0
        %1652 = vmatpush1.msra.mxu0 0.0
        %1653 = vmatprep.subr.mxu0 0.0
        %1654 = vmatpush1.msra.mxu0 0.0
        %1655 = vmatprep.subr.mxu0 0.0
        %1656 = vmatpush1.msra.mxu0 0.0
        %1657 = vmatprep.mubr.f32.mxu0 0.0
        %1658 = vmatmul.mubr.f32.gmra.mrb[0].mxu0 %v1591
        %v1659 = vpop.f32.mrb[0].mxu0
        %v1660 = vadd.f32 %v1587, %v1659
        %v1661 = vpop.f32.mrb[0].mxu0
        %1662 = vdwg.mxu0
        %v1663 = vadd.f32 %v1660, %v786
        %v1664 = vxor.u32 %v1663, 2147483648
        %v1665 = vmul.f32 %v1664, 1.442695
        %v1666 = vpow.pop %v1665
        %v1667 = vadd.f32 %v1666, 1.0
        %v1668 = vrcp.pop %v1667
        %v1669 = vmul.f32 1.0, %v1668
        %v1670 = vtanh.pop %v1663
        %v1671 = vmul.f32 %v1669, %v1506
        %1673 = vrot.lane.b32.xlu0 %v1670, 64
        %v1674 = vpop.permute.xlu0 %1673
        %v1676 = vmul.f32 %v1669, %v1674
        %1678 = vrot.lane.b32.xlu0 %v1676, 32
        %v1679 = vpop.permute.xlu0 %1678
        %v1681 = vadd.f32 %v1671, %v1679
        %v1682 = vtanh.pop %v1681
        %1684 = vrot.lane.b32.xlu0 %v1682, 64
        %v1685 = vpop.permute.xlu0 %1684
        %v1687 = vmul.f32 %v1669, %v1685
        %s1688 = scalar_lea.vmem %s556, 48 [#allocation3]
        %v1689 = vld [vmem:[%s1688] sm:$0xff]
        %1691 = vrot.lane.b32.xlu0 %v1687, 32
        %v1692 = vpop.permute.xlu0 %1691
        %v1693 = vsel %vm630, %v1692, 0
        %1695 = vmatprep.subr.mxu0 0.0
        %1696 = vmatpush1.msra.mxu0 %v616
        %1697 = vmatprep.subr.mxu0 0.0
        %1698 = vmatpush1.msra.mxu0 %v617
        %1699 = vmatprep.subr.mxu0 0.0
        %1700 = vmatpush1.msra.mxu0 %v618
        %1701 = vmatprep.subr.mxu0 0.0
        %1702 = vmatpush1.msra.mxu0 %v619
        %1703 = vmatprep.subr.mxu0 0.0
        %1704 = vmatpush1.msra.mxu0 0.0
        %1705 = vmatprep.subr.mxu0 0.0
        %1706 = vmatpush1.msra.mxu0 0.0
        %1707 = vmatprep.subr.mxu0 0.0
        %1708 = vmatpush1.msra.mxu0 0.0
        %1709 = vmatprep.subr.mxu0 0.0
        %1710 = vmatpush1.msra.mxu0 0.0
        %1711 = vmatprep.subr.mxu0 0.0
        %1712 = vmatpush1.msra.mxu0 0.0
        %1713 = vmatprep.subr.mxu0 0.0
        %1714 = vmatpush1.msra.mxu0 0.0
        %1715 = vmatprep.subr.mxu0 0.0
        %1716 = vmatpush1.msra.mxu0 0.0
        %1717 = vmatprep.subr.mxu0 0.0
        %1718 = vmatpush1.msra.mxu0 0.0
        %1719 = vmatprep.subr.mxu0 0.0
        %1720 = vmatpush1.msra.mxu0 0.0
        %1721 = vmatprep.subr.mxu0 0.0
        %1722 = vmatpush1.msra.mxu0 0.0
        %1723 = vmatprep.subr.mxu0 0.0
        %1724 = vmatpush1.msra.mxu0 0.0
        %1725 = vmatprep.subr.mxu0 0.0
        %1726 = vmatpush1.msra.mxu0 0.0
        %1727 = vmatprep.subr.mxu0 0.0
        %1728 = vmatpush1.msra.mxu0 0.0
        %1729 = vmatprep.subr.mxu0 0.0
        %1730 = vmatpush1.msra.mxu0 0.0
        %1731 = vmatprep.subr.mxu0 0.0
        %1732 = vmatpush1.msra.mxu0 0.0
        %1733 = vmatprep.subr.mxu0 0.0
        %1734 = vmatpush1.msra.mxu0 0.0
        %1735 = vmatprep.subr.mxu0 0.0
        %1736 = vmatpush1.msra.mxu0 0.0
        %1737 = vmatprep.subr.mxu0 0.0
        %1738 = vmatpush1.msra.mxu0 0.0
        %1739 = vmatprep.subr.mxu0 0.0
        %1740 = vmatpush1.msra.mxu0 0.0
        %1741 = vmatprep.subr.mxu0 0.0
        %1742 = vmatpush1.msra.mxu0 0.0
        %1743 = vmatprep.subr.mxu0 0.0
        %1744 = vmatpush1.msra.mxu0 0.0
        %1745 = vmatprep.subr.mxu0 0.0
        %1746 = vmatpush1.msra.mxu0 0.0
        %1747 = vmatprep.subr.mxu0 0.0
        %1748 = vmatpush1.msra.mxu0 0.0
        %1749 = vmatprep.subr.mxu0 0.0
        %1750 = vmatpush1.msra.mxu0 0.0
        %1751 = vmatprep.subr.mxu0 0.0
        %1752 = vmatpush1.msra.mxu0 0.0
        %1753 = vmatprep.subr.mxu0 0.0
        %1754 = vmatpush1.msra.mxu0 0.0
        %1755 = vmatprep.subr.mxu0 0.0
        %1756 = vmatpush1.msra.mxu0 0.0
        %1757 = vmatprep.subr.mxu0 0.0
        %1758 = vmatpush1.msra.mxu0 0.0
        %1759 = vmatprep.mubr.f32.mxu0 0.0
        %1760 = vmatmul.mubr.f32.gmra.mrb[0].mxu0 %v1693
        %v1761 = vpop.f32.mrb[0].mxu0
        %v1762 = vadd.f32 0.0, %v1761
        %v1763 = vpop.f32.mrb[0].mxu0
        %1764 = vdwg.mxu0
        %v1766 = vsel %vm704, %v1689, 0
        %1768 = vmatprep.subr.mxu0 0.0
        %1769 = vmatpush1.msra.mxu0 %v710
        %1770 = vmatprep.subr.mxu0 0.0
        %1771 = vmatpush1.msra.mxu0 0.0
        %1772 = vmatprep.subr.mxu0 0.0
        %1773 = vmatpush1.msra.mxu0 0.0
        %1774 = vmatprep.subr.mxu0 0.0
        %1775 = vmatpush1.msra.mxu0 0.0
        %1776 = vmatprep.subr.mxu0 0.0
        %1777 = vmatpush1.msra.mxu0 0.0
        %1778 = vmatprep.subr.mxu0 0.0
        %1779 = vmatpush1.msra.mxu0 0.0
        %1780 = vmatprep.subr.mxu0 0.0
        %1781 = vmatpush1.msra.mxu0 0.0
        %1782 = vmatprep.subr.mxu0 0.0
        %1783 = vmatpush1.msra.mxu0 0.0
        %1784 = vmatprep.subr.mxu0 0.0
        %1785 = vmatpush1.msra.mxu0 0.0
        %1786 = vmatprep.subr.mxu0 0.0
        %1787 = vmatpush1.msra.mxu0 0.0
        %1788 = vmatprep.subr.mxu0 0.0
        %1789 = vmatpush1.msra.mxu0 0.0
        %1790 = vmatprep.subr.mxu0 0.0
        %1791 = vmatpush1.msra.mxu0 0.0
        %1792 = vmatprep.subr.mxu0 0.0
        %1793 = vmatpush1.msra.mxu0 0.0
        %1794 = vmatprep.subr.mxu0 0.0
        %1795 = vmatpush1.msra.mxu0 0.0
        %1796 = vmatprep.subr.mxu0 0.0
        %1797 = vmatpush1.msra.mxu0 0.0
        %1798 = vmatprep.subr.mxu0 0.0
        %1799 = vmatpush1.msra.mxu0 0.0
        %1800 = vmatprep.subr.mxu0 0.0
        %1801 = vmatpush1.msra.mxu0 0.0
        %1802 = vmatprep.subr.mxu0 0.0
        %1803 = vmatpush1.msra.mxu0 0.0
        %1804 = vmatprep.subr.mxu0 0.0
        %1805 = vmatpush1.msra.mxu0 0.0
        %1806 = vmatprep.subr.mxu0 0.0
        %1807 = vmatpush1.msra.mxu0 0.0
        %1808 = vmatprep.subr.mxu0 0.0
        %1809 = vmatpush1.msra.mxu0 0.0
        %1810 = vmatprep.subr.mxu0 0.0
        %1811 = vmatpush1.msra.mxu0 0.0
        %1812 = vmatprep.subr.mxu0 0.0
        %1813 = vmatpush1.msra.mxu0 0.0
        %1814 = vmatprep.subr.mxu0 0.0
        %1815 = vmatpush1.msra.mxu0 0.0
        %1816 = vmatprep.subr.mxu0 0.0
        %1817 = vmatpush1.msra.mxu0 0.0
        %1818 = vmatprep.subr.mxu0 0.0
        %1819 = vmatpush1.msra.mxu0 0.0
        %1820 = vmatprep.subr.mxu0 0.0
        %1821 = vmatpush1.msra.mxu0 0.0
        %1822 = vmatprep.subr.mxu0 0.0
        %1823 = vmatpush1.msra.mxu0 0.0
        %1824 = vmatprep.subr.mxu0 0.0
        %1825 = vmatpush1.msra.mxu0 0.0
        %1826 = vmatprep.subr.mxu0 0.0
        %1827 = vmatpush1.msra.mxu0 0.0
        %1828 = vmatprep.subr.mxu0 0.0
        %1829 = vmatpush1.msra.mxu0 0.0
        %1830 = vmatprep.subr.mxu0 0.0
        %1831 = vmatpush1.msra.mxu0 0.0
        %1832 = vmatprep.mubr.f32.mxu0 0.0
        %1833 = vmatmul.mubr.f32.gmra.mrb[0].mxu0 %v1766
        %v1834 = vpop.f32.mrb[0].mxu0
        %v1835 = vadd.f32 %v1762, %v1834
        %v1836 = vpop.f32.mrb[0].mxu0
        %1837 = vdwg.mxu0
        %v1838 = vadd.f32 %v1835, %v786
        %v1839 = vxor.u32 %v1838, 2147483648
        %v1840 = vmul.f32 %v1839, 1.442695
        %v1841 = vpow.pop %v1840
        %v1842 = vadd.f32 %v1841, 1.0
        %v1843 = vrcp.pop %v1842
        %v1844 = vmul.f32 1.0, %v1843
        %v1845 = vtanh.pop %v1838
        %v1846 = vmul.f32 %v1844, %v1681
        %1848 = vrot.lane.b32.xlu0 %v1845, 64
        %v1849 = vpop.permute.xlu0 %1848
        %v1851 = vmul.f32 %v1844, %v1849
        %1853 = vrot.lane.b32.xlu0 %v1851, 32
        %v1854 = vpop.permute.xlu0 %1853
        %v1856 = vadd.f32 %v1846, %v1854
        %v1857 = vtanh.pop %v1856
        %1859 = vrot.lane.b32.xlu0 %v1857, 64
        %v1860 = vpop.permute.xlu0 %1859
        %v1862 = vmul.f32 %v1844, %v1860
        %s1863 = scalar_lea.vmem %s556, 56 [#allocation3]
        %v1864 = vld [vmem:[%s1863] sm:$0xff]
        %1866 = vrot.lane.b32.xlu0 %v1862, 32
        %v1867 = vpop.permute.xlu0 %1866
        %v1868 = vsel %vm630, %v1867, 0
        %1870 = vmatprep.subr.mxu0 0.0
        %1871 = vmatpush1.msra.mxu0 %v616
        %1872 = vmatprep.subr.mxu0 0.0
        %1873 = vmatpush1.msra.mxu0 %v617
        %1874 = vmatprep.subr.mxu0 0.0
        %1875 = vmatpush1.msra.mxu0 %v618
        %1876 = vmatprep.subr.mxu0 0.0
        %1877 = vmatpush1.msra.mxu0 %v619
        %1878 = vmatprep.subr.mxu0 0.0
        %1879 = vmatpush1.msra.mxu0 0.0
        %1880 = vmatprep.subr.mxu0 0.0
        %1881 = vmatpush1.msra.mxu0 0.0
        %1882 = vmatprep.subr.mxu0 0.0
        %1883 = vmatpush1.msra.mxu0 0.0
        %1884 = vmatprep.subr.mxu0 0.0
        %1885 = vmatpush1.msra.mxu0 0.0
        %1886 = vmatprep.subr.mxu0 0.0
        %1887 = vmatpush1.msra.mxu0 0.0
        %1888 = vmatprep.subr.mxu0 0.0
        %1889 = vmatpush1.msra.mxu0 0.0
        %1890 = vmatprep.subr.mxu0 0.0
        %1891 = vmatpush1.msra.mxu0 0.0
        %1892 = vmatprep.subr.mxu0 0.0
        %1893 = vmatpush1.msra.mxu0 0.0
        %1894 = vmatprep.subr.mxu0 0.0
        %1895 = vmatpush1.msra.mxu0 0.0
        %1896 = vmatprep.subr.mxu0 0.0
        %1897 = vmatpush1.msra.mxu0 0.0
        %1898 = vmatprep.subr.mxu0 0.0
        %1899 = vmatpush1.msra.mxu0 0.0
        %1900 = vmatprep.subr.mxu0 0.0
        %1901 = vmatpush1.msra.mxu0 0.0
        %1902 = vmatprep.subr.mxu0 0.0
        %1903 = vmatpush1.msra.mxu0 0.0
        %1904 = vmatprep.subr.mxu0 0.0
        %1905 = vmatpush1.msra.mxu0 0.0
        %1906 = vmatprep.subr.mxu0 0.0
        %1907 = vmatpush1.msra.mxu0 0.0
        %1908 = vmatprep.subr.mxu0 0.0
        %1909 = vmatpush1.msra.mxu0 0.0
        %1910 = vmatprep.subr.mxu0 0.0
        %1911 = vmatpush1.msra.mxu0 0.0
        %1912 = vmatprep.subr.mxu0 0.0
        %1913 = vmatpush1.msra.mxu0 0.0
        %1914 = vmatprep.subr.mxu0 0.0
        %1915 = vmatpush1.msra.mxu0 0.0
        %1916 = vmatprep.subr.mxu0 0.0
        %1917 = vmatpush1.msra.mxu0 0.0
        %1918 = vmatprep.subr.mxu0 0.0
        %1919 = vmatpush1.msra.mxu0 0.0
        %1920 = vmatprep.subr.mxu0 0.0
        %1921 = vmatpush1.msra.mxu0 0.0
        %1922 = vmatprep.subr.mxu0 0.0
        %1923 = vmatpush1.msra.mxu0 0.0
        %1924 = vmatprep.subr.mxu0 0.0
        %1925 = vmatpush1.msra.mxu0 0.0
        %1926 = vmatprep.subr.mxu0 0.0
        %1927 = vmatpush1.msra.mxu0 0.0
        %1928 = vmatprep.subr.mxu0 0.0
        %1929 = vmatpush1.msra.mxu0 0.0
        %1930 = vmatprep.subr.mxu0 0.0
        %1931 = vmatpush1.msra.mxu0 0.0
        %1932 = vmatprep.subr.mxu0 0.0
        %1933 = vmatpush1.msra.mxu0 0.0
        %1934 = vmatprep.mubr.f32.mxu0 0.0
        %1935 = vmatmul.mubr.f32.gmra.mrb[0].mxu0 %v1868
        %v1936 = vpop.f32.mrb[0].mxu0
        %v1937 = vadd.f32 0.0, %v1936
        %v1938 = vpop.f32.mrb[0].mxu0
        %1939 = vdwg.mxu0
        %v1941 = vsel %vm704, %v1864, 0
        %1943 = vmatprep.subr.mxu0 0.0
        %1944 = vmatpush1.msra.mxu0 %v710
        %1945 = vmatprep.subr.mxu0 0.0
        %1946 = vmatpush1.msra.mxu0 0.0
        %1947 = vmatprep.subr.mxu0 0.0
        %1948 = vmatpush1.msra.mxu0 0.0
        %1949 = vmatprep.subr.mxu0 0.0
        %1950 = vmatpush1.msra.mxu0 0.0
        %1951 = vmatprep.subr.mxu0 0.0
        %1952 = vmatpush1.msra.mxu0 0.0
        %1953 = vmatprep.subr.mxu0 0.0
        %1954 = vmatpush1.msra.mxu0 0.0
        %1955 = vmatprep.subr.mxu0 0.0
        %1956 = vmatpush1.msra.mxu0 0.0
        %1957 = vmatprep.subr.mxu0 0.0
        %1958 = vmatpush1.msra.mxu0 0.0
        %1959 = vmatprep.subr.mxu0 0.0
        %1960 = vmatpush1.msra.mxu0 0.0
        %1961 = vmatprep.subr.mxu0 0.0
        %1962 = vmatpush1.msra.mxu0 0.0
        %1963 = vmatprep.subr.mxu0 0.0
        %1964 = vmatpush1.msra.mxu0 0.0
        %1965 = vmatprep.subr.mxu0 0.0
        %1966 = vmatpush1.msra.mxu0 0.0
        %1967 = vmatprep.subr.mxu0 0.0
        %1968 = vmatpush1.msra.mxu0 0.0
        %1969 = vmatprep.subr.mxu0 0.0
        %1970 = vmatpush1.msra.mxu0 0.0
        %1971 = vmatprep.subr.mxu0 0.0
        %1972 = vmatpush1.msra.mxu0 0.0
        %1973 = vmatprep.subr.mxu0 0.0
        %1974 = vmatpush1.msra.mxu0 0.0
        %1975 = vmatprep.subr.mxu0 0.0
        %1976 = vmatpush1.msra.mxu0 0.0
        %1977 = vmatprep.subr.mxu0 0.0
        %1978 = vmatpush1.msra.mxu0 0.0
        %1979 = vmatprep.subr.mxu0 0.0
        %1980 = vmatpush1.msra.mxu0 0.0
        %1981 = vmatprep.subr.mxu0 0.0
        %1982 = vmatpush1.msra.mxu0 0.0
        %1983 = vmatprep.subr.mxu0 0.0
        %1984 = vmatpush1.msra.mxu0 0.0
        %1985 = vmatprep.subr.mxu0 0.0
        %1986 = vmatpush1.msra.mxu0 0.0
        %1987 = vmatprep.subr.mxu0 0.0
        %1988 = vmatpush1.msra.mxu0 0.0
        %1989 = vmatprep.subr.mxu0 0.0
        %1990 = vmatpush1.msra.mxu0 0.0
        %1991 = vmatprep.subr.mxu0 0.0
        %1992 = vmatpush1.msra.mxu0 0.0
        %1993 = vmatprep.subr.mxu0 0.0
        %1994 = vmatpush1.msra.mxu0 0.0
        %1995 = vmatprep.subr.mxu0 0.0
        %1996 = vmatpush1.msra.mxu0 0.0
        %1997 = vmatprep.subr.mxu0 0.0
        %1998 = vmatpush1.msra.mxu0 0.0
        %1999 = vmatprep.subr.mxu0 0.0
        %2000 = vmatpush1.msra.mxu0 0.0
        %2001 = vmatprep.subr.mxu0 0.0
        %2002 = vmatpush1.msra.mxu0 0.0
        %2003 = vmatprep.subr.mxu0 0.0
        %2004 = vmatpush1.msra.mxu0 0.0
        %2005 = vmatprep.subr.mxu0 0.0
        %2006 = vmatpush1.msra.mxu0 0.0
        %2007 = vmatprep.mubr.f32.mxu0 0.0
        %2008 = vmatmul.mubr.f32.gmra.mrb[0].mxu0 %v1941
        %v2009 = vpop.f32.mrb[0].mxu0
        %v2010 = vadd.f32 %v1937, %v2009
        %v2011 = vpop.f32.mrb[0].mxu0
        %2012 = vdwg.mxu0
        %v2013 = vadd.f32 %v2010, %v786
        %v2014 = vxor.u32 %v2013, 2147483648
        %v2015 = vmul.f32 %v2014, 1.442695
        %v2016 = vpow.pop %v2015
        %v2017 = vadd.f32 %v2016, 1.0
        %v2018 = vrcp.pop %v2017
        %v2019 = vmul.f32 1.0, %v2018
        %v2020 = vtanh.pop %v2013
        %v2021 = vmul.f32 %v2019, %v1856
        %2023 = vrot.lane.b32.xlu0 %v2020, 64
        %v2024 = vpop.permute.xlu0 %2023
        %v2026 = vmul.f32 %v2019, %v2024
        %2028 = vrot.lane.b32.xlu0 %v2026, 32
        %v2029 = vpop.permute.xlu0 %2028
        %v2031 = vadd.f32 %v2021, %v2029
        %v2032 = vtanh.pop %v2031
        %2034 = vrot.lane.b32.xlu0 %v2032, 64
        %v2035 = vpop.permute.xlu0 %2034
        %v2037 = vmul.f32 %v2019, %v2035
        %v2038 = vld [vmem:[%s563] sm:$0xff]
        %2040 = vrot.lane.b32.xlu0 %v2037, 32
        %v2041 = vpop.permute.xlu0 %2040
        %v2042 = vsel %vm630, %v2041, 0
        %2044 = vmatprep.subr.mxu0 0.0
        %2045 = vmatpush1.msra.mxu0 %v622
        %2046 = vmatprep.subr.mxu0 0.0
        %2047 = vmatpush1.msra.mxu0 %v623
        %2048 = vmatprep.subr.mxu0 0.0
        %2049 = vmatpush1.msra.mxu0 %v624
        %2050 = vmatprep.subr.mxu0 0.0
        %2051 = vmatpush1.msra.mxu0 %v625
        %2052 = vmatprep.subr.mxu0 0.0
        %2053 = vmatpush1.msra.mxu0 0.0
        %2054 = vmatprep.subr.mxu0 0.0
        %2055 = vmatpush1.msra.mxu0 0.0
        %2056 = vmatprep.subr.mxu0 0.0
        %2057 = vmatpush1.msra.mxu0 0.0
        %2058 = vmatprep.subr.mxu0 0.0
        %2059 = vmatpush1.msra.mxu0 0.0
        %2060 = vmatprep.subr.mxu0 0.0
        %2061 = vmatpush1.msra.mxu0 0.0
        %2062 = vmatprep.subr.mxu0 0.0
        %2063 = vmatpush1.msra.mxu0 0.0
        %2064 = vmatprep.subr.mxu0 0.0
        %2065 = vmatpush1.msra.mxu0 0.0
        %2066 = vmatprep.subr.mxu0 0.0
        %2067 = vmatpush1.msra.mxu0 0.0
        %2068 = vmatprep.subr.mxu0 0.0
        %2069 = vmatpush1.msra.mxu0 0.0
        %2070 = vmatprep.subr.mxu0 0.0
        %2071 = vmatpush1.msra.mxu0 0.0
        %2072 = vmatprep.subr.mxu0 0.0
        %2073 = vmatpush1.msra.mxu0 0.0
        %2074 = vmatprep.subr.mxu0 0.0
        %2075 = vmatpush1.msra.mxu0 0.0
        %2076 = vmatprep.subr.mxu0 0.0
        %2077 = vmatpush1.msra.mxu0 0.0
        %2078 = vmatprep.subr.mxu0 0.0
        %2079 = vmatpush1.msra.mxu0 0.0
        %2080 = vmatprep.subr.mxu0 0.0
        %2081 = vmatpush1.msra.mxu0 0.0
        %2082 = vmatprep.subr.mxu0 0.0
        %2083 = vmatpush1.msra.mxu0 0.0
        %2084 = vmatprep.subr.mxu0 0.0
        %2085 = vmatpush1.msra.mxu0 0.0
        %2086 = vmatprep.subr.mxu0 0.0
        %2087 = vmatpush1.msra.mxu0 0.0
        %2088 = vmatprep.subr.mxu0 0.0
        %2089 = vmatpush1.msra.mxu0 0.0
        %2090 = vmatprep.subr.mxu0 0.0
        %2091 = vmatpush1.msra.mxu0 0.0
        %2092 = vmatprep.subr.mxu0 0.0
        %2093 = vmatpush1.msra.mxu0 0.0
        %2094 = vmatprep.subr.mxu0 0.0
        %2095 = vmatpush1.msra.mxu0 0.0
        %2096 = vmatprep.subr.mxu0 0.0
        %2097 = vmatpush1.msra.mxu0 0.0
        %2098 = vmatprep.subr.mxu0 0.0
        %2099 = vmatpush1.msra.mxu0 0.0
        %2100 = vmatprep.subr.mxu0 0.0
        %2101 = vmatpush1.msra.mxu0 0.0
        %2102 = vmatprep.subr.mxu0 0.0
        %2103 = vmatpush1.msra.mxu0 0.0
        %2104 = vmatprep.subr.mxu0 0.0
        %2105 = vmatpush1.msra.mxu0 0.0
        %2106 = vmatprep.subr.mxu0 0.0
        %2107 = vmatpush1.msra.mxu0 0.0
        %2108 = vmatprep.mubr.f32.mxu0 0.0
        %2109 = vmatmul.mubr.f32.gmra.mrb[0].mxu0 %v2042
        %v2110 = vpop.f32.mrb[0].mxu0
        %v2111 = vadd.f32 0.0, %v2110
        %v2112 = vpop.f32.mrb[0].mxu0
        %2113 = vdwg.mxu0
        %v2115 = vsel %vm704, %v2038, 0
        %v2118 = vsel %vm708, %v621, 0
        %2120 = vmatprep.subr.mxu0 0.0
        %2121 = vmatpush1.msra.mxu0 %v2118
        %2122 = vmatprep.subr.mxu0 0.0
        %2123 = vmatpush1.msra.mxu0 0.0
        %2124 = vmatprep.subr.mxu0 0.0
        %2125 = vmatpush1.msra.mxu0 0.0
        %2126 = vmatprep.subr.mxu0 0.0
        %2127 = vmatpush1.msra.mxu0 0.0
        %2128 = vmatprep.subr.mxu0 0.0
        %2129 = vmatpush1.msra.mxu0 0.0
        %2130 = vmatprep.subr.mxu0 0.0
        %2131 = vmatpush1.msra.mxu0 0.0
        %2132 = vmatprep.subr.mxu0 0.0
        %2133 = vmatpush1.msra.mxu0 0.0
        %2134 = vmatprep.subr.mxu0 0.0
        %2135 = vmatpush1.msra.mxu0 0.0
        %2136 = vmatprep.subr.mxu0 0.0
        %2137 = vmatpush1.msra.mxu0 0.0
        %2138 = vmatprep.subr.mxu0 0.0
        %2139 = vmatpush1.msra.mxu0 0.0
        %2140 = vmatprep.subr.mxu0 0.0
        %2141 = vmatpush1.msra.mxu0 0.0
        %2142 = vmatprep.subr.mxu0 0.0
        %2143 = vmatpush1.msra.mxu0 0.0
        %2144 = vmatprep.subr.mxu0 0.0
        %2145 = vmatpush1.msra.mxu0 0.0
        %2146 = vmatprep.subr.mxu0 0.0
        %2147 = vmatpush1.msra.mxu0 0.0
        %2148 = vmatprep.subr.mxu0 0.0
        %2149 = vmatpush1.msra.mxu0 0.0
        %2150 = vmatprep.subr.mxu0 0.0
        %2151 = vmatpush1.msra.mxu0 0.0
        %2152 = vmatprep.subr.mxu0 0.0
        %2153 = vmatpush1.msra.mxu0 0.0
        %2154 = vmatprep.subr.mxu0 0.0
        %2155 = vmatpush1.msra.mxu0 0.0
        %2156 = vmatprep.subr.mxu0 0.0
        %2157 = vmatpush1.msra.mxu0 0.0
        %2158 = vmatprep.subr.mxu0 0.0
        %2159 = vmatpush1.msra.mxu0 0.0
        %2160 = vmatprep.subr.mxu0 0.0
        %2161 = vmatpush1.msra.mxu0 0.0
        %2162 = vmatprep.subr.mxu0 0.0
        %2163 = vmatpush1.msra.mxu0 0.0
        %2164 = vmatprep.subr.mxu0 0.0
        %2165 = vmatpush1.msra.mxu0 0.0
        %2166 = vmatprep.subr.mxu0 0.0
        %2167 = vmatpush1.msra.mxu0 0.0
        %2168 = vmatprep.subr.mxu0 0.0
        %2169 = vmatpush1.msra.mxu0 0.0
        %2170 = vmatprep.subr.mxu0 0.0
        %2171 = vmatpush1.msra.mxu0 0.0
        %2172 = vmatprep.subr.mxu0 0.0
        %2173 = vmatpush1.msra.mxu0 0.0
        %2174 = vmatprep.subr.mxu0 0.0
        %2175 = vmatpush1.msra.mxu0 0.0
        %2176 = vmatprep.subr.mxu0 0.0
        %2177 = vmatpush1.msra.mxu0 0.0
        %2178 = vmatprep.subr.mxu0 0.0
        %2179 = vmatpush1.msra.mxu0 0.0
        %2180 = vmatprep.subr.mxu0 0.0
        %2181 = vmatpush1.msra.mxu0 0.0
        %2182 = vmatprep.subr.mxu0 0.0
        %2183 = vmatpush1.msra.mxu0 0.0
        %2184 = vmatprep.mubr.f32.mxu0 0.0
        %2185 = vmatmul.mubr.f32.gmra.mrb[0].mxu0 %v2115
        %v2186 = vpop.f32.mrb[0].mxu0
        %v2187 = vadd.f32 %v2111, %v2186
        %v2188 = vpop.f32.mrb[0].mxu0
        %2189 = vdwg.mxu0
        %v2191 = vlaneseq
        %v2192 = vshrl.u32 %v2191, 7
        %v2193 = vsub.s32 0, %v2192
        %v2194 = vrot.slane %v626, %v2193
        %v2196 = vadd.f32 %v2187, %v2194
        %v2197 = vxor.u32 %v2196, 2147483648
        %v2198 = vmul.f32 %v2197, 1.442695
        %v2199 = vpow.pop %v2198
        %v2200 = vadd.f32 %v2199, 1.0
        %v2201 = vrcp.pop %v2200
        %v2202 = vmul.f32 1.0, %v2201
        %v2203 = vtanh.pop %v2196
        %v2204 = vmul.f32 %v2202, %v2031
        %2206 = vrot.lane.b32.xlu0 %v2203, 64
        %v2207 = vpop.permute.xlu0 %2206
        %v2209 = vmul.f32 %v2202, %v2207
        %2211 = vrot.lane.b32.xlu0 %v2209, 32
        %v2212 = vpop.permute.xlu0 %2211
        %v2214 = vadd.f32 %v2204, %v2212
        %v2215 = vtanh.pop %v2214
        %2217 = vrot.lane.b32.xlu0 %v2215, 64
        %v2218 = vpop.permute.xlu0 %2217
        %v2220 = vmul.f32 %v2202, %v2218
        %v2222 = vlaneseq
        %v2223 = vshrl.u32 %v2222, 7
        %v2224 = vsub.s32 0, %v2223
        %v2225 = vrot.slane %v627, %v2224
        %2226 = vrot.lane.b32.xlu0 %v2225, 96
        %v2227 = vpop.permute.xlu0 %2226
        %v2229 = vmul.f32 %v2220, %v2227
        %2231 = vrot.lane.b32.xlu0 %v2229, 32
        %v2232 = vpop.permute.xlu0 %2231
        %v2234 = vsel %vm630, %v2232, 0.0
        %2235 = vadd.xlane.f32.xlu0 %v2234
        %v2236 = vpop.xlane.xlu0 %2235
        %s2237 = scalar_lea.vmem %s563, 8 [#allocation4]
        %v2238 = vld [vmem:[%s2237] sm:$0xff]
        %2240 = vrot.lane.b32.xlu0 %v2220, 32
        %v2241 = vpop.permute.xlu0 %2240
        %v2242 = vsel %vm630, %v2241, 0
        %2244 = vmatprep.subr.mxu0 0.0
        %2245 = vmatpush1.msra.mxu0 %v622
        %2246 = vmatprep.subr.mxu0 0.0
        %2247 = vmatpush1.msra.mxu0 %v623
        %2248 = vmatprep.subr.mxu0 0.0
        %2249 = vmatpush1.msra.mxu0 %v624
        %2250 = vmatprep.subr.mxu0 0.0
        %2251 = vmatpush1.msra.mxu0 %v625
        %2252 = vmatprep.subr.mxu0 0.0
        %2253 = vmatpush1.msra.mxu0 0.0
        %2254 = vmatprep.subr.mxu0 0.0
        %2255 = vmatpush1.msra.mxu0 0.0
        %2256 = vmatprep.subr.mxu0 0.0
        %2257 = vmatpush1.msra.mxu0 0.0
        %2258 = vmatprep.subr.mxu0 0.0
        %2259 = vmatpush1.msra.mxu0 0.0
        %2260 = vmatprep.subr.mxu0 0.0
        %2261 = vmatpush1.msra.mxu0 0.0
        %2262 = vmatprep.subr.mxu0 0.0
        %2263 = vmatpush1.msra.mxu0 0.0
        %2264 = vmatprep.subr.mxu0 0.0
        %2265 = vmatpush1.msra.mxu0 0.0
        %2266 = vmatprep.subr.mxu0 0.0
        %2267 = vmatpush1.msra.mxu0 0.0
        %2268 = vmatprep.subr.mxu0 0.0
        %2269 = vmatpush1.msra.mxu0 0.0
        %2270 = vmatprep.subr.mxu0 0.0
        %2271 = vmatpush1.msra.mxu0 0.0
        %2272 = vmatprep.subr.mxu0 0.0
        %2273 = vmatpush1.msra.mxu0 0.0
        %2274 = vmatprep.subr.mxu0 0.0
        %2275 = vmatpush1.msra.mxu0 0.0
        %2276 = vmatprep.subr.mxu0 0.0
        %2277 = vmatpush1.msra.mxu0 0.0
        %2278 = vmatprep.subr.mxu0 0.0
        %2279 = vmatpush1.msra.mxu0 0.0
        %2280 = vmatprep.subr.mxu0 0.0
        %2281 = vmatpush1.msra.mxu0 0.0
        %2282 = vmatprep.subr.mxu0 0.0
        %2283 = vmatpush1.msra.mxu0 0.0
        %2284 = vmatprep.subr.mxu0 0.0
        %2285 = vmatpush1.msra.mxu0 0.0
        %2286 = vmatprep.subr.mxu0 0.0
        %2287 = vmatpush1.msra.mxu0 0.0
        %2288 = vmatprep.subr.mxu0 0.0
        %2289 = vmatpush1.msra.mxu0 0.0
        %2290 = vmatprep.subr.mxu0 0.0
        %2291 = vmatpush1.msra.mxu0 0.0
        %2292 = vmatprep.subr.mxu0 0.0
        %2293 = vmatpush1.msra.mxu0 0.0
        %2294 = vmatprep.subr.mxu0 0.0
        %2295 = vmatpush1.msra.mxu0 0.0
        %2296 = vmatprep.subr.mxu0 0.0
        %2297 = vmatpush1.msra.mxu0 0.0
        %2298 = vmatprep.subr.mxu0 0.0
        %2299 = vmatpush1.msra.mxu0 0.0
        %2300 = vmatprep.subr.mxu0 0.0
        %2301 = vmatpush1.msra.mxu0 0.0
        %2302 = vmatprep.subr.mxu0 0.0
        %2303 = vmatpush1.msra.mxu0 0.0
        %2304 = vmatprep.subr.mxu0 0.0
        %2305 = vmatpush1.msra.mxu0 0.0
        %2306 = vmatprep.subr.mxu0 0.0
        %2307 = vmatpush1.msra.mxu0 0.0
        %2308 = vmatprep.mubr.f32.mxu0 0.0
        %2309 = vmatmul.mubr.f32.gmra.mrb[0].mxu0 %v2242
        %v2310 = vpop.f32.mrb[0].mxu0
        %v2311 = vadd.f32 0.0, %v2310
        %v2312 = vpop.f32.mrb[0].mxu0
        %2313 = vdwg.mxu0
        %v2315 = vsel %vm704, %v2238, 0
        %2317 = vmatprep.subr.mxu0 0.0
        %2318 = vmatpush1.msra.mxu0 %v2118
        %2319 = vmatprep.subr.mxu0 0.0
        %2320 = vmatpush1.msra.mxu0 0.0
        %2321 = vmatprep.subr.mxu0 0.0
        %2322 = vmatpush1.msra.mxu0 0.0
        %2323 = vmatprep.subr.mxu0 0.0
        %2324 = vmatpush1.msra.mxu0 0.0
        %2325 = vmatprep.subr.mxu0 0.0
        %2326 = vmatpush1.msra.mxu0 0.0
        %2327 = vmatprep.subr.mxu0 0.0
        %2328 = vmatpush1.msra.mxu0 0.0
        %2329 = vmatprep.subr.mxu0 0.0
        %2330 = vmatpush1.msra.mxu0 0.0
        %2331 = vmatprep.subr.mxu0 0.0
        %2332 = vmatpush1.msra.mxu0 0.0
        %2333 = vmatprep.subr.mxu0 0.0
        %2334 = vmatpush1.msra.mxu0 0.0
        %2335 = vmatprep.subr.mxu0 0.0
        %2336 = vmatpush1.msra.mxu0 0.0
        %2337 = vmatprep.subr.mxu0 0.0
        %2338 = vmatpush1.msra.mxu0 0.0
        %2339 = vmatprep.subr.mxu0 0.0
        %2340 = vmatpush1.msra.mxu0 0.0
        %2341 = vmatprep.subr.mxu0 0.0
        %2342 = vmatpush1.msra.mxu0 0.0
        %2343 = vmatprep.subr.mxu0 0.0
        %2344 = vmatpush1.msra.mxu0 0.0
        %2345 = vmatprep.subr.mxu0 0.0
        %2346 = vmatpush1.msra.mxu0 0.0
        %2347 = vmatprep.subr.mxu0 0.0
        %2348 = vmatpush1.msra.mxu0 0.0
        %2349 = vmatprep.subr.mxu0 0.0
        %2350 = vmatpush1.msra.mxu0 0.0
        %2351 = vmatprep.subr.mxu0 0.0
        %2352 = vmatpush1.msra.mxu0 0.0
        %2353 = vmatprep.subr.mxu0 0.0
        %2354 = vmatpush1.msra.mxu0 0.0
        %2355 = vmatprep.subr.mxu0 0.0
        %2356 = vmatpush1.msra.mxu0 0.0
        %2357 = vmatprep.subr.mxu0 0.0
        %2358 = vmatpush1.msra.mxu0 0.0
        %2359 = vmatprep.subr.mxu0 0.0
        %2360 = vmatpush1.msra.mxu0 0.0
        %2361 = vmatprep.subr.mxu0 0.0
        %2362 = vmatpush1.msra.mxu0 0.0
        %2363 = vmatprep.subr.mxu0 0.0
        %2364 = vmatpush1.msra.mxu0 0.0
        %2365 = vmatprep.subr.mxu0 0.0
        %2366 = vmatpush1.msra.mxu0 0.0
        %2367 = vmatprep.subr.mxu0 0.0
        %2368 = vmatpush1.msra.mxu0 0.0
        %2369 = vmatprep.subr.mxu0 0.0
        %2370 = vmatpush1.msra.mxu0 0.0
        %2371 = vmatprep.subr.mxu0 0.0
        %2372 = vmatpush1.msra.mxu0 0.0
        %2373 = vmatprep.subr.mxu0 0.0
        %2374 = vmatpush1.msra.mxu0 0.0
        %2375 = vmatprep.subr.mxu0 0.0
        %2376 = vmatpush1.msra.mxu0 0.0
        %2377 = vmatprep.subr.mxu0 0.0
        %2378 = vmatpush1.msra.mxu0 0.0
        %2379 = vmatprep.subr.mxu0 0.0
        %2380 = vmatpush1.msra.mxu0 0.0
        %2381 = vmatprep.mubr.f32.mxu0 0.0
        %2382 = vmatmul.mubr.f32.gmra.mrb[0].mxu0 %v2315
        %v2383 = vpop.f32.mrb[0].mxu0
        %v2384 = vadd.f32 %v2311, %v2383
        %v2385 = vpop.f32.mrb[0].mxu0
        %2386 = vdwg.mxu0
        %v2387 = vadd.f32 %v2384, %v2194
        %v2388 = vxor.u32 %v2387, 2147483648
        %v2389 = vmul.f32 %v2388, 1.442695
        %v2390 = vpow.pop %v2389
        %v2391 = vadd.f32 %v2390, 1.0
        %v2392 = vrcp.pop %v2391
        %v2393 = vmul.f32 1.0, %v2392
        %v2394 = vtanh.pop %v2387
        %v2395 = vmul.f32 %v2393, %v2214
        %2397 = vrot.lane.b32.xlu0 %v2394, 64
        %v2398 = vpop.permute.xlu0 %2397
        %v2400 = vmul.f32 %v2393, %v2398
        %2402 = vrot.lane.b32.xlu0 %v2400, 32
        %v2403 = vpop.permute.xlu0 %2402
        %v2405 = vadd.f32 %v2395, %v2403
        %v2406 = vtanh.pop %v2405
        %2408 = vrot.lane.b32.xlu0 %v2406, 64
        %v2409 = vpop.permute.xlu0 %2408
        %v2411 = vmul.f32 %v2393, %v2409
        %v2412 = vmul.f32 %v2411, %v2227
        %2414 = vrot.lane.b32.xlu0 %v2412, 32
        %v2415 = vpop.permute.xlu0 %2414
        %v2417 = vsel %vm630, %v2415, 0.0
        %2418 = vadd.xlane.f32.xlu0 %v2417
        %v2419 = vpop.xlane.xlu0 %2418
        %vm2420 = vcmask 7168
        %v2421 = vsel %vm2420, %v2236, %v2419
        %v2423 = vlaneseq
        %v2424 = vshrl.u32 %v2423, 7
        %v2425 = vsub.s32 0, %v2424
        %v2426 = vrot.slane %v628, %v2425
        %2427 = vset.pattern.permute.xlu0 0
        %2428 = vperm.xlu0 %2427, %v2426
        %v2429 = vpop.permute.xlu0 %2428
        %v2431 = vadd.f32 %v2421, %v2429
        %vm2432 = vcmask 15360
        %2433 = vst.msk [vmem:[%s614] sm:$0xff] %vm2432, %v2431
        %p2434 = scmp.lt.s32.totalorder %s28, 1
        %s2435 = scalar_select %p2434, %s28, 1
        %s2436 = smul.addr %s2435, 8
        %s2437 = scalar_lea.vmem %s15, %s2436
        // Predicated region
        $region157: #{net_forward.1} parent=147 // pred_check
          %p2438 = pneg %p371
        $region158: #{net_forward.1} parent=147 // pred_check_branch
          %2440 = sbr.rel (%p2438) target = $region160
        $region159: #{net_forward.1} parent=147 // pred_region
          _
        $region160: #{net_forward.1} parent=147 // pred_fallthru
          _
      $region148: #{net_forward.1} parent=5 // pred_fallthru
        _
      %p2441 = scmp.le.s32.totalorder 2, %s23
      // Predicated region
      $region161: #{net_forward.1} parent=5 // pred_check
        %p2442 = pneg %p2441
      $region162: #{net_forward.1} parent=5 // pred_check_branch
        %2444 = sbr.rel (%p2442) target = $region164
      $region163: #{net_forward.1} parent=5 // pred_region
        %s2445 = ssub.s32 %s23, 2
        // Predicated region
        $region165: #{net_forward.1} parent=163 // pred_check
          %p2446 = pneg %p377
        $region166: #{net_forward.1} parent=163 // pred_check_branch
          %2448 = sbr.rel (%p2446) target = $region168
        $region167: #{net_forward.1} parent=163 // pred_region
          %p2449 = scmp.lt.s32.totalorder %s29, 1
          %s2450 = scalar_select %p2449, %s29, 1
          %s2451 = smul.addr %s2450, 8
          %s2452 = scalar_lea.vmem %s15, %s2451
        $region168: #{net_forward.1} parent=163 // pred_fallthru
          _
      $region164: #{net_forward.1} parent=5 // pred_fallthru
        _
    $region6: #{net_forward.1} parent=1 // loop_footer
      %s27 = sadd.s32 1, %s23
    $region7: #{net_forward.1} parent=1 // loop_footer_branch
      %22 = sbr.rel target = $region3
    $region8: #{net_forward.1} parent=1 // loop_exit
      _

</llo_original>
